<compile_context>
chip_gen: v5e
topology: v5e:2x2
jax: 0.10.0
libtpu: 0.0.40
codegen_flags: <defaults>
</compile_context>

<pallas_src>
import jax
import jax.numpy as jnp
from jax.experimental import pallas as pl
from jax.experimental.pallas import tpu as pltpu

EPS = 1e-5


def conv1x1_bn_kernel(w_ref, x_ref, gamma_ref, beta_ref, o_ref):
    # w_ref:     [Cout, Cin]  bf16 (prepared weight)
    # x_ref:     [Cin, M]     f32
    # gamma_ref: [Cout, 1]    f32
    # beta_ref:  [Cout, 1]    f32
    # o_ref:     [Cout, M]    f32
    x = x_ref[...].astype(jnp.bfloat16)   # MXU-native bf16 operand (in-VMEM cast)
    w = w_ref[...]

    # 1x1 conv == matmul on the MXU, accumulate in f32.
    y = jnp.dot(w, x, preferred_element_type=jnp.float32)   # [Cout, M]

    # BatchNorm2d, training mode: per-channel batch statistics over (N,H,W),
    # biased variance, eps inside rsqrt. All BN math in f32.
    # Two-pass (y - mean)^2 form kept for numerical safety (avoids E[y^2]-E[y]^2
    # cancellation); VPU/XLU have plenty of slack at this size.
    mean = jnp.mean(y, axis=1, keepdims=True)                # [Cout, 1]
    diff = y - mean
    var = jnp.mean(diff * diff, axis=1, keepdims=True)       # [Cout, 1]
    inv_std = jax.lax.rsqrt(var + EPS)

    o_ref[...] = diff * inv_std * gamma_ref[...] + beta_ref[...]


def prepare_weight(weight_oihw):
    """One-time preprocessing (weights are static): OIHW 1x1 -> [Cout, Cin] bf16.

    Hoisted out of the per-call path so the hot path never re-lays-out or
    re-casts the weight; bf16 also halves the dominant weight DMA.
    """
    Cout, Cin = weight_oihw.shape[0], weight_oihw.shape[1]
    return weight_oihw.reshape(Cout, Cin).astype(jnp.bfloat16)


@jax.jit
def conv2d_batchnorm(x_nchw, w2d, gamma, beta):
    """x_nchw: [N, Cin, H, W] f32; w2d: [Cout, Cin] bf16 (see prepare_weight);
    gamma/beta: [Cout] f32. Returns NCHW [N, Cout, H, W] f32."""
    N, Cin, H, W = x_nchw.shape
    Cout = w2d.shape[0]
    M = N * H * W

    # NCHW -> [Cin, M]. For N == 1 (the module's shape) this is a pure reshape,
    # i.e. no data movement; only N > 1 needs a real transpose in this orientation.
    if N == 1:
        x2d = x_nchw.reshape(Cin, M)
    else:
        x2d = jnp.transpose(x_nchw.reshape(N, Cin, H * W), (1, 0, 2)).reshape(Cin, M)

    gamma2d = gamma.reshape(Cout, 1)
    beta2d = beta.reshape(Cout, 1)

    out2d = pl.pallas_call(
        conv1x1_bn_kernel,
        out_shape=jax.ShapeDtypeStruct((Cout, M), jnp.float32),
        grid=(1,),
        in_specs=[
            pl.BlockSpec((Cout, Cin), lambda i: (0, 0)),
            pl.BlockSpec((Cin, M), lambda i: (0, 0)),
            pl.BlockSpec((Cout, 1), lambda i: (0, 0)),
            pl.BlockSpec((Cout, 1), lambda i: (0, 0)),
        ],
        out_specs=pl.BlockSpec((Cout, M), lambda i: (0, 0)),
        compiler_params=pltpu.CompilerParams(
            dimension_semantics=("arbitrary",),
        ),
    )(w2d, x2d, gamma2d, beta2d)

    # [Cout, M] -> NCHW. Pure reshape for N == 1.
    if N == 1:
        return out2d.reshape(1, Cout, H, W)
    return jnp.transpose(out2d.reshape(Cout, N, H, W), (1, 0, 2, 3))


if __name__ == "__main__":
    # Shapes implied by the module: Conv2d(1312 -> 128, k=1), input [1, 1312, 7, 7].
    N, Cin, H, W = 1, 1312, 7, 7
    Cout = 128

    key = jax.random.PRNGKey(0)
    kx, kw, kg, kb = jax.random.split(key, 4)

    x = jax.random.normal(kx, (N, Cin, H, W), dtype=jnp.float32)
    # Deterministic synthetic parameters (no checkpoint load).
    weight = jax.random.normal(kw, (Cout, Cin, 1, 1), dtype=jnp.float32) * 0.02
    gamma = jnp.ones((Cout,), dtype=jnp.float32) + 0.01 * jax.random.normal(kg, (Cout,))
    beta = 0.01 * jax.random.normal(kb, (Cout,), dtype=jnp.float32)

    # One-time weight preprocessing, outside the per-call hot path.
    w2d = prepare_weight(weight)

    out = conv2d_batchnorm(x, w2d, gamma, beta)
    out = jax.block_until_ready(out)

    assert out.shape == (N, Cout, H, W), out.shape
    print("KERNEL_OK")
</pallas_src>

<mosaic_0001>
module attributes {stable_mosaic.version = 11 : i64} {
  func.func @conv1x1_bn_kernel(%arg0: i32, %arg1: memref<128x1312xbf16, #tpu.memory_space<vmem>>, %arg2: memref<1312x49xf32, #tpu.memory_space<vmem>>, %arg3: memref<128x1xf32, #tpu.memory_space<vmem>>, %arg4: memref<128x1xf32, #tpu.memory_space<vmem>>, %arg5: memref<128x49xf32, #tpu.memory_space<vmem>>) attributes {dimension_semantics = [#tpu.dimension_semantics<arbitrary>], iteration_bounds = array<i64: 1>, scalar_prefetch = 0 : i64, scratch_operands = 0 : i64, tpu.core_type = #tpu.core_type<tc>, window_params = [{pipeline_mode = #tpu.pipeline_mode<synchronous>, transform_indices = @transform_0, window_bounds = array<i64: 128, 1312>}, {pipeline_mode = #tpu.pipeline_mode<synchronous>, transform_indices = @transform_1, window_bounds = array<i64: 1312, 49>}, {pipeline_mode = #tpu.pipeline_mode<synchronous>, transform_indices = @transform_2, window_bounds = array<i64: 128, 1>}, {pipeline_mode = #tpu.pipeline_mode<synchronous>, transform_indices = @transform_3, window_bounds = array<i64: 128, 1>}, {pipeline_mode = #tpu.pipeline_mode<synchronous>, transform_indices = @transform_4, window_bounds = array<i64: 128, 49>}]} {
    %c0 = arith.constant 0 : index
    %c0_0 = arith.constant 0 : index
    %0 = vector.load %arg2[%c0, %c0_0] : memref<1312x49xf32, #tpu.memory_space<vmem>>, vector<1312x49xf32>
    %1 = arith.truncf %0 : vector<1312x49xf32> to vector<1312x49xbf16>
    %c0_1 = arith.constant 0 : index
    %c0_2 = arith.constant 0 : index
    %2 = vector.load %arg1[%c0_1, %c0_2] : memref<128x1312xbf16, #tpu.memory_space<vmem>>, vector<128x1312xbf16>
    %cst = arith.constant dense<0.000000e+00> : vector<128x49xf32>
    %3 = tpu.matmul %2, %1, %cst {dimension_numbers = #tpu.dot_dimension_numbers<[1], [0], [0], [1], [0, 0, 1, 1], [], []>} : vector<128x1312xbf16>, vector<1312x49xbf16>, vector<128x49xf32> -> vector<128x49xf32>
    %cst_3 = arith.constant dense<0.000000e+00> : vector<128xf32>
    %4 = vector.multi_reduction <add>, %3, %cst_3 [1] : vector<128x49xf32> to vector<128xf32>
    %5 = vector.shape_cast %4 : vector<128xf32> to vector<128x1xf32>
    %cst_4 = arith.constant 4.900000e+01 : f32
    %6 = vector.broadcast %cst_4 : f32 to vector<128x1xf32>
    %7 = arith.divf %5, %6 : vector<128x1xf32>
    %8 = vector.broadcast %7 : vector<128x1xf32> to vector<128x49xf32>
    %9 = arith.subf %3, %8 : vector<128x49xf32>
    %10 = arith.mulf %9, %9 : vector<128x49xf32>
    %cst_5 = arith.constant dense<0.000000e+00> : vector<128xf32>
    %11 = vector.multi_reduction <add>, %10, %cst_5 [1] : vector<128x49xf32> to vector<128xf32>
    %12 = vector.shape_cast %11 : vector<128xf32> to vector<128x1xf32>
    %cst_6 = arith.constant 4.900000e+01 : f32
    %13 = vector.broadcast %cst_6 : f32 to vector<128x1xf32>
    %14 = arith.divf %12, %13 : vector<128x1xf32>
    %cst_7 = arith.constant 9.99999974E-6 : f32
    %15 = vector.broadcast %cst_7 : f32 to vector<128x1xf32>
    %16 = arith.addf %14, %15 : vector<128x1xf32>
    %17 = math.rsqrt %16 : vector<128x1xf32>
    %18 = vector.broadcast %17 : vector<128x1xf32> to vector<128x49xf32>
    %19 = arith.mulf %9, %18 : vector<128x49xf32>
    %c0_8 = arith.constant 0 : index
    %c0_9 = arith.constant 0 : index
    %20 = vector.load %arg3[%c0_8, %c0_9] : memref<128x1xf32, #tpu.memory_space<vmem>>, vector<128x1xf32>
    %21 = vector.broadcast %20 : vector<128x1xf32> to vector<128x49xf32>
    %22 = arith.mulf %19, %21 : vector<128x49xf32>
    %c0_10 = arith.constant 0 : index
    %c0_11 = arith.constant 0 : index
    %23 = vector.load %arg4[%c0_10, %c0_11] : memref<128x1xf32, #tpu.memory_space<vmem>>, vector<128x1xf32>
    %24 = vector.broadcast %23 : vector<128x1xf32> to vector<128x49xf32>
    %25 = arith.addf %22, %24 : vector<128x49xf32>
    %c0_12 = arith.constant 0 : index
    %c0_13 = arith.constant 0 : index
    %26 = vector.load %arg5[%c0_12, %c0_13] : memref<128x49xf32, #tpu.memory_space<vmem>>, vector<128x49xf32>
    tpu.vector_store %arg5[%c0_12, %c0_13], %25 {strides = array<i32>} : memref<128x49xf32, #tpu.memory_space<vmem>>, vector<128x49xf32>,
    return
  }
  func.func @transform_0(%arg0: i32) -> (i32, i32) {
    %c0_i32 = arith.constant 0 : i32
    %c0_i32_0 = arith.constant 0 : i32
    %c0_i32_1 = arith.constant 0 : i32
    return %c0_i32, %c0_i32_0 : i32, i32
  }
  func.func @transform_1(%arg0: i32) -> (i32, i32) {
    %c0_i32 = arith.constant 0 : i32
    %c0_i32_0 = arith.constant 0 : i32
    %c0_i32_1 = arith.constant 0 : i32
    return %c0_i32, %c0_i32_0 : i32, i32
  }
  func.func @transform_2(%arg0: i32) -> (i32, i32) {
    %c0_i32 = arith.constant 0 : i32
    %c0_i32_0 = arith.constant 0 : i32
    %c0_i32_1 = arith.constant 0 : i32
    return %c0_i32, %c0_i32_0 : i32, i32
  }
  func.func @transform_3(%arg0: i32) -> (i32, i32) {
    %c0_i32 = arith.constant 0 : i32
    %c0_i32_0 = arith.constant 0 : i32
    %c0_i32_1 = arith.constant 0 : i32
    return %c0_i32, %c0_i32_0 : i32, i32
  }
  func.func @transform_4(%arg0: i32) -> (i32, i32) {
    %c0_i32 = arith.constant 0 : i32
    %c0_i32_0 = arith.constant 0 : i32
    %c0_i32_1 = arith.constant 0 : i32
    return %c0_i32, %c0_i32_0 : i32, i32
  }
}

</mosaic_0001>

<llo_original>
// kernel: conv2d_batchnorm.1
$region0: #{conv2d_batchnorm.1}
  #allocation0 [shape = 'u32[]', space=smem, size = 0x4, offset = 0x4, fixed_abs, tag = 'smem constant byte address 0x4 - core index']
  #allocation1 [shape = 'u32[72,128]{1,0:T(1,128)}', space=vmem, size = 0x9000, scoped, tag = 'internal scratch']
  %s0 = inlined_call_operand.vmem [shape: bf16[128,1312], index: 0, kind: input, shape index: {}]
  %s1 = inlined_call_operand.vmem [shape: f32[1312,49], index: 1, kind: input, shape index: {}]
  %s2 = inlined_call_operand.vmem [shape: f32[128,1], index: 2, kind: input, shape index: {}]
  %s3 = inlined_call_operand.vmem [shape: f32[128,1], index: 3, kind: input, shape index: {}]
  %s4 = inlined_call_operand.vmem [shape: f32[128,49], index: 4, kind: output, shape index: {}]
  %s5 = sld [smem:[#allocation0]]
  $region26: #{conv2d_batchnorm.1} parent=0
    _
  %s7 = ssub.s32 1, %s5
  %s8 = scalar_select 0, %s7, %s5
  // Predicated region
  $region2: #{conv2d_batchnorm.1} parent=0 // pred_check
    _
  $region3: #{conv2d_batchnorm.1} parent=0 // pred_check_branch
    %10 = sbr.rel (0) target = $region5
  $region4: #{conv2d_batchnorm.1} parent=0 // pred_region
    _
  $region5: #{conv2d_batchnorm.1} parent=0 // pred_fallthru
    _
  // Predicated region
  $region6: #{conv2d_batchnorm.1} parent=0 // pred_check
    _
  $region7: #{conv2d_batchnorm.1} parent=0 // pred_check_branch
    %12 = sbr.rel (0) target = $region9
  $region8: #{conv2d_batchnorm.1} parent=0 // pred_region
    _
  $region9: #{conv2d_batchnorm.1} parent=0 // pred_fallthru
    _
  // Predicated region
  $region10: #{conv2d_batchnorm.1} parent=0 // pred_check
    _
  $region11: #{conv2d_batchnorm.1} parent=0 // pred_check_branch
    %14 = sbr.rel (0) target = $region13
  $region12: #{conv2d_batchnorm.1} parent=0 // pred_region
    _
  $region13: #{conv2d_batchnorm.1} parent=0 // pred_fallthru
    _
  // Predicated region
  $region14: #{conv2d_batchnorm.1} parent=0 // pred_check
    _
  $region15: #{conv2d_batchnorm.1} parent=0 // pred_check_branch
    %16 = sbr.rel (0) target = $region17
  $region16: #{conv2d_batchnorm.1} parent=0 // pred_region
    _
  $region17: #{conv2d_batchnorm.1} parent=0 // pred_fallthru
    _
  %v18 = vld [vmem:[%s1] sm:$0xff]
  %v19 = vld [vmem:[%s1 + $0x8] sm:$0xff]
  %v20 = vld [vmem:[%s1 + $0x10] sm:$0xff]
  %v21 = vld [vmem:[%s1 + $0x18] sm:$0xff]
  %v22 = vld [vmem:[%s1 + $0x20] sm:$0xff]
  %v23 = vld [vmem:[%s1 + $0x28] sm:$0xff]
  %v24 = vld [vmem:[%s1 + $0x30] sm:$0xff]
  %v25 = vld [vmem:[%s1 + $0x38] sm:$0xff]
  %v26 = vld [vmem:[%s1 + $0x40] sm:$0xff]
  %v27 = vld [vmem:[%s1 + $0x48] sm:$0xff]
  %v28 = vld [vmem:[%s1 + $0x50] sm:$0xff]
  %v29 = vld [vmem:[%s1 + $0x58] sm:$0xff]
  %v30 = vld [vmem:[%s1 + $0x60] sm:$0xff]
  %v31 = vld [vmem:[%s1 + $0x68] sm:$0xff]
  %v32 = vld [vmem:[%s1 + $0x70] sm:$0xff]
  %v33 = vld [vmem:[%s1 + $0x78] sm:$0xff]
  %v34 = vld [vmem:[%s1 + $0x80] sm:$0xff]
  %v35 = vld [vmem:[%s1 + $0x88] sm:$0xff]
  %v36 = vld [vmem:[%s1 + $0x90] sm:$0xff]
  %v37 = vld [vmem:[%s1 + $0x98] sm:$0xff]
  %v38 = vld [vmem:[%s1 + $0xa0] sm:$0xff]
  %v39 = vld [vmem:[%s1 + $0xa8] sm:$0xff]
  %v40 = vld [vmem:[%s1 + $0xb0] sm:$0xff]
  %v41 = vld [vmem:[%s1 + $0xb8] sm:$0xff]
  %v42 = vld [vmem:[%s1 + $0xc0] sm:$0xff]
  %v43 = vld [vmem:[%s1 + $0xc8] sm:$0xff]
  %v44 = vld [vmem:[%s1 + $0xd0] sm:$0xff]
  %v45 = vld [vmem:[%s1 + $0xd8] sm:$0xff]
  %v46 = vld [vmem:[%s1 + $0xe0] sm:$0xff]
  %v47 = vld [vmem:[%s1 + $0xe8] sm:$0xff]
  %v48 = vld [vmem:[%s1 + $0xf0] sm:$0xff]
  %v49 = vld [vmem:[%s1 + $0xf8] sm:$0xff]
  %v50 = vld [vmem:[%s1 + $0x100] sm:$0xff]
  %v51 = vld [vmem:[%s1 + $0x108] sm:$0xff]
  %v52 = vld [vmem:[%s1 + $0x110] sm:$0xff]
  %v53 = vld [vmem:[%s1 + $0x118] sm:$0xff]
  %v54 = vld [vmem:[%s1 + $0x120] sm:$0xff]
  %v55 = vld [vmem:[%s1 + $0x128] sm:$0xff]
  %v56 = vld [vmem:[%s1 + $0x130] sm:$0xff]
  %v57 = vld [vmem:[%s1 + $0x138] sm:$0xff]
  %v58 = vld [vmem:[%s1 + $0x140] sm:$0xff]
  %v59 = vld [vmem:[%s1 + $0x148] sm:$0xff]
  %v60 = vld [vmem:[%s1 + $0x150] sm:$0xff]
  %v61 = vld [vmem:[%s1 + $0x158] sm:$0xff]
  %v62 = vld [vmem:[%s1 + $0x160] sm:$0xff]
  %v63 = vld [vmem:[%s1 + $0x168] sm:$0xff]
  %v64 = vld [vmem:[%s1 + $0x170] sm:$0xff]
  %v65 = vld [vmem:[%s1 + $0x178] sm:$0xff]
  %v66 = vld [vmem:[%s1 + $0x180] sm:$0xff]
  %v67 = vld [vmem:[%s1 + $0x188] sm:$0xff]
  %v68 = vld [vmem:[%s1 + $0x190] sm:$0xff]
  %v69 = vld [vmem:[%s1 + $0x198] sm:$0xff]
  %v70 = vld [vmem:[%s1 + $0x1a0] sm:$0xff]
  %v71 = vld [vmem:[%s1 + $0x1a8] sm:$0xff]
  %v72 = vld [vmem:[%s1 + $0x1b0] sm:$0xff]
  %v73 = vld [vmem:[%s1 + $0x1b8] sm:$0xff]
  %v74 = vld [vmem:[%s1 + $0x1c0] sm:$0xff]
  %v75 = vld [vmem:[%s1 + $0x1c8] sm:$0xff]
  %v76 = vld [vmem:[%s1 + $0x1d0] sm:$0xff]
  %v77 = vld [vmem:[%s1 + $0x1d8] sm:$0xff]
  %v78 = vld [vmem:[%s1 + $0x1e0] sm:$0xff]
  %v79 = vld [vmem:[%s1 + $0x1e8] sm:$0xff]
  %v80 = vld [vmem:[%s1 + $0x1f0] sm:$0xff]
  %v81 = vld [vmem:[%s1 + $0x1f8] sm:$0xff]
  %v82 = vld [vmem:[%s1 + $0x200] sm:$0xff]
  %v83 = vld [vmem:[%s1 + $0x208] sm:$0xff]
  %v84 = vld [vmem:[%s1 + $0x210] sm:$0xff]
  %v85 = vld [vmem:[%s1 + $0x218] sm:$0xff]
  %v86 = vld [vmem:[%s1 + $0x220] sm:$0xff]
  %v87 = vld [vmem:[%s1 + $0x228] sm:$0xff]
  %v88 = vld [vmem:[%s1 + $0x230] sm:$0xff]
  %v89 = vld [vmem:[%s1 + $0x238] sm:$0xff]
  %v90 = vld [vmem:[%s1 + $0x240] sm:$0xff]
  %v91 = vld [vmem:[%s1 + $0x248] sm:$0xff]
  %v92 = vld [vmem:[%s1 + $0x250] sm:$0xff]
  %v93 = vld [vmem:[%s1 + $0x258] sm:$0xff]
  %v94 = vld [vmem:[%s1 + $0x260] sm:$0xff]
  %v95 = vld [vmem:[%s1 + $0x268] sm:$0xff]
  %v96 = vld [vmem:[%s1 + $0x270] sm:$0xff]
  %v97 = vld [vmem:[%s1 + $0x278] sm:$0xff]
  %v98 = vld [vmem:[%s1 + $0x280] sm:$0xff]
  %v99 = vld [vmem:[%s1 + $0x288] sm:$0xff]
  %v100 = vld [vmem:[%s1 + $0x290] sm:$0xff]
  %v101 = vld [vmem:[%s1 + $0x298] sm:$0xff]
  %v102 = vld [vmem:[%s1 + $0x2a0] sm:$0xff]
  %v103 = vld [vmem:[%s1 + $0x2a8] sm:$0xff]
  %v104 = vld [vmem:[%s1 + $0x2b0] sm:$0xff]
  %v105 = vld [vmem:[%s1 + $0x2b8] sm:$0xff]
  %v106 = vld [vmem:[%s1 + $0x2c0] sm:$0xff]
  %v107 = vld [vmem:[%s1 + $0x2c8] sm:$0xff]
  %v108 = vld [vmem:[%s1 + $0x2d0] sm:$0xff]
  %v109 = vld [vmem:[%s1 + $0x2d8] sm:$0xff]
  %v110 = vld [vmem:[%s1 + $0x2e0] sm:$0xff]
  %v111 = vld [vmem:[%s1 + $0x2e8] sm:$0xff]
  %v112 = vld [vmem:[%s1 + $0x2f0] sm:$0xff]
  %v113 = vld [vmem:[%s1 + $0x2f8] sm:$0xff]
  %v114 = vld [vmem:[%s1 + $0x300] sm:$0xff]
  %v115 = vld [vmem:[%s1 + $0x308] sm:$0xff]
  %v116 = vld [vmem:[%s1 + $0x310] sm:$0xff]
  %v117 = vld [vmem:[%s1 + $0x318] sm:$0xff]
  %v118 = vld [vmem:[%s1 + $0x320] sm:$0xff]
  %v119 = vld [vmem:[%s1 + $0x328] sm:$0xff]
  %v120 = vld [vmem:[%s1 + $0x330] sm:$0xff]
  %v121 = vld [vmem:[%s1 + $0x338] sm:$0xff]
  %v122 = vld [vmem:[%s1 + $0x340] sm:$0xff]
  %v123 = vld [vmem:[%s1 + $0x348] sm:$0xff]
  %v124 = vld [vmem:[%s1 + $0x350] sm:$0xff]
  %v125 = vld [vmem:[%s1 + $0x358] sm:$0xff]
  %v126 = vld [vmem:[%s1 + $0x360] sm:$0xff]
  %v127 = vld [vmem:[%s1 + $0x368] sm:$0xff]
  %v128 = vld [vmem:[%s1 + $0x370] sm:$0xff]
  %v129 = vld [vmem:[%s1 + $0x378] sm:$0xff]
  %v130 = vld [vmem:[%s1 + $0x380] sm:$0xff]
  %v131 = vld [vmem:[%s1 + $0x388] sm:$0xff]
  %v132 = vld [vmem:[%s1 + $0x390] sm:$0xff]
  %v133 = vld [vmem:[%s1 + $0x398] sm:$0xff]
  %v134 = vld [vmem:[%s1 + $0x3a0] sm:$0xff]
  %v135 = vld [vmem:[%s1 + $0x3a8] sm:$0xff]
  %v136 = vld [vmem:[%s1 + $0x3b0] sm:$0xff]
  %v137 = vld [vmem:[%s1 + $0x3b8] sm:$0xff]
  %v138 = vld [vmem:[%s1 + $0x3c0] sm:$0xff]
  %v139 = vld [vmem:[%s1 + $0x3c8] sm:$0xff]
  %v140 = vld [vmem:[%s1 + $0x3d0] sm:$0xff]
  %v141 = vld [vmem:[%s1 + $0x3d8] sm:$0xff]
  %v142 = vld [vmem:[%s1 + $0x3e0] sm:$0xff]
  %v143 = vld [vmem:[%s1 + $0x3e8] sm:$0xff]
  %v144 = vld [vmem:[%s1 + $0x3f0] sm:$0xff]
  %v145 = vld [vmem:[%s1 + $0x3f8] sm:$0xff]
  %v146 = vld [vmem:[%s1 + $0x400] sm:$0xff]
  %v147 = vld [vmem:[%s1 + $0x408] sm:$0xff]
  %v148 = vld [vmem:[%s1 + $0x410] sm:$0xff]
  %v149 = vld [vmem:[%s1 + $0x418] sm:$0xff]
  %v150 = vld [vmem:[%s1 + $0x420] sm:$0xff]
  %v151 = vld [vmem:[%s1 + $0x428] sm:$0xff]
  %v152 = vld [vmem:[%s1 + $0x430] sm:$0xff]
  %v153 = vld [vmem:[%s1 + $0x438] sm:$0xff]
  %v154 = vld [vmem:[%s1 + $0x440] sm:$0xff]
  %v155 = vld [vmem:[%s1 + $0x448] sm:$0xff]
  %v156 = vld [vmem:[%s1 + $0x450] sm:$0xff]
  %v157 = vld [vmem:[%s1 + $0x458] sm:$0xff]
  %v158 = vld [vmem:[%s1 + $0x460] sm:$0xff]
  %v159 = vld [vmem:[%s1 + $0x468] sm:$0xff]
  %v160 = vld [vmem:[%s1 + $0x470] sm:$0xff]
  %v161 = vld [vmem:[%s1 + $0x478] sm:$0xff]
  %v162 = vld [vmem:[%s1 + $0x480] sm:$0xff]
  %v163 = vld [vmem:[%s1 + $0x488] sm:$0xff]
  %v164 = vld [vmem:[%s1 + $0x490] sm:$0xff]
  %v165 = vld [vmem:[%s1 + $0x498] sm:$0xff]
  %v166 = vld [vmem:[%s1 + $0x4a0] sm:$0xff]
  %v167 = vld [vmem:[%s1 + $0x4a8] sm:$0xff]
  %v168 = vld [vmem:[%s1 + $0x4b0] sm:$0xff]
  %v169 = vld [vmem:[%s1 + $0x4b8] sm:$0xff]
  %v170 = vld [vmem:[%s1 + $0x4c0] sm:$0xff]
  %v171 = vld [vmem:[%s1 + $0x4c8] sm:$0xff]
  %v172 = vld [vmem:[%s1 + $0x4d0] sm:$0xff]
  %v173 = vld [vmem:[%s1 + $0x4d8] sm:$0xff]
  %v174 = vld [vmem:[%s1 + $0x4e0] sm:$0xff]
  %v175 = vld [vmem:[%s1 + $0x4e8] sm:$0xff]
  %v176 = vld [vmem:[%s1 + $0x4f0] sm:$0xff]
  %v177 = vld [vmem:[%s1 + $0x4f8] sm:$0xff]
  %v178 = vld [vmem:[%s1 + $0x500] sm:$0xff]
  %v179 = vld [vmem:[%s1 + $0x508] sm:$0xff]
  %v180 = vld [vmem:[%s1 + $0x510] sm:$0xff]
  %v181 = vld [vmem:[%s1 + $0x518] sm:$0xff]
  %v182 = vpack.c.bf16 %v19, %v18
  %v183 = vpack.c.bf16 %v21, %v20
  %v184 = vpack.c.bf16 %v23, %v22
  %v185 = vpack.c.bf16 %v25, %v24
  %v186 = vpack.c.bf16 %v27, %v26
  %v187 = vpack.c.bf16 %v29, %v28
  %v188 = vpack.c.bf16 %v31, %v30
  %v189 = vpack.c.bf16 %v33, %v32
  %v190 = vpack.c.bf16 %v35, %v34
  %v191 = vpack.c.bf16 %v37, %v36
  %v192 = vpack.c.bf16 %v39, %v38
  %v193 = vpack.c.bf16 %v41, %v40
  %v194 = vpack.c.bf16 %v43, %v42
  %v195 = vpack.c.bf16 %v45, %v44
  %v196 = vpack.c.bf16 %v47, %v46
  %v197 = vpack.c.bf16 %v49, %v48
  %v198 = vpack.c.bf16 %v51, %v50
  %v199 = vpack.c.bf16 %v53, %v52
  %v200 = vpack.c.bf16 %v55, %v54
  %v201 = vpack.c.bf16 %v57, %v56
  %v202 = vpack.c.bf16 %v59, %v58
  %v203 = vpack.c.bf16 %v61, %v60
  %v204 = vpack.c.bf16 %v63, %v62
  %v205 = vpack.c.bf16 %v65, %v64
  %v206 = vpack.c.bf16 %v67, %v66
  %v207 = vpack.c.bf16 %v69, %v68
  %v208 = vpack.c.bf16 %v71, %v70
  %v209 = vpack.c.bf16 %v73, %v72
  %v210 = vpack.c.bf16 %v75, %v74
  %v211 = vpack.c.bf16 %v77, %v76
  %v212 = vpack.c.bf16 %v79, %v78
  %v213 = vpack.c.bf16 %v81, %v80
  %v214 = vpack.c.bf16 %v83, %v82
  %v215 = vpack.c.bf16 %v85, %v84
  %v216 = vpack.c.bf16 %v87, %v86
  %v217 = vpack.c.bf16 %v89, %v88
  %v218 = vpack.c.bf16 %v91, %v90
  %v219 = vpack.c.bf16 %v93, %v92
  %v220 = vpack.c.bf16 %v95, %v94
  %v221 = vpack.c.bf16 %v97, %v96
  %v222 = vpack.c.bf16 %v99, %v98
  %v223 = vpack.c.bf16 %v101, %v100
  %v224 = vpack.c.bf16 %v103, %v102
  %v225 = vpack.c.bf16 %v105, %v104
  %v226 = vpack.c.bf16 %v107, %v106
  %v227 = vpack.c.bf16 %v109, %v108
  %v228 = vpack.c.bf16 %v111, %v110
  %v229 = vpack.c.bf16 %v113, %v112
  %v230 = vpack.c.bf16 %v115, %v114
  %v231 = vpack.c.bf16 %v117, %v116
  %v232 = vpack.c.bf16 %v119, %v118
  %v233 = vpack.c.bf16 %v121, %v120
  %v234 = vpack.c.bf16 %v123, %v122
  %v235 = vpack.c.bf16 %v125, %v124
  %v236 = vpack.c.bf16 %v127, %v126
  %v237 = vpack.c.bf16 %v129, %v128
  %v238 = vpack.c.bf16 %v131, %v130
  %v239 = vpack.c.bf16 %v133, %v132
  %v240 = vpack.c.bf16 %v135, %v134
  %v241 = vpack.c.bf16 %v137, %v136
  %v242 = vpack.c.bf16 %v139, %v138
  %v243 = vpack.c.bf16 %v141, %v140
  %v244 = vpack.c.bf16 %v143, %v142
  %v245 = vpack.c.bf16 %v145, %v144
  %v246 = vpack.c.bf16 %v147, %v146
  %v247 = vpack.c.bf16 %v149, %v148
  %v248 = vpack.c.bf16 %v151, %v150
  %v249 = vpack.c.bf16 %v153, %v152
  %v250 = vpack.c.bf16 %v155, %v154
  %v251 = vpack.c.bf16 %v157, %v156
  %v252 = vpack.c.bf16 %v159, %v158
  %v253 = vpack.c.bf16 %v161, %v160
  %v254 = vpack.c.bf16 %v163, %v162
  %v255 = vpack.c.bf16 %v165, %v164
  %v256 = vpack.c.bf16 %v167, %v166
  %v257 = vpack.c.bf16 %v169, %v168
  %v258 = vpack.c.bf16 %v171, %v170
  %v259 = vpack.c.bf16 %v173, %v172
  %v260 = vpack.c.bf16 %v175, %v174
  %v261 = vpack.c.bf16 %v177, %v176
  %v262 = vpack.c.bf16 %v179, %v178
  %v263 = vpack.c.bf16 %v181, %v180
  %v264 = vld [vmem:[%s0] sm:$0xff]
  %v265 = vld [vmem:[%s0 + $0x8] sm:$0xff]
  %v266 = vld [vmem:[%s0 + $0x10] sm:$0xff]
  %v267 = vld [vmem:[%s0 + $0x18] sm:$0xff]
  %v268 = vld [vmem:[%s0 + $0x20] sm:$0xff]
  %v269 = vld [vmem:[%s0 + $0x28] sm:$0xf]
  %v270 = vld [vmem:[%s0 + $0x2c] sm:$0xff]
  %v271 = vld [vmem:[%s0 + $0x34] sm:$0xff]
  %v272 = vld [vmem:[%s0 + $0x3c] sm:$0xff]
  %v273 = vld [vmem:[%s0 + $0x44] sm:$0xff]
  %v274 = vld [vmem:[%s0 + $0x4c] sm:$0xff]
  %v275 = vld [vmem:[%s0 + $0x54] sm:$0xf]
  %v276 = vld [vmem:[%s0 + $0x58] sm:$0xff]
  %v277 = vld [vmem:[%s0 + $0x60] sm:$0xff]
  %v278 = vld [vmem:[%s0 + $0x68] sm:$0xff]
  %v279 = vld [vmem:[%s0 + $0x70] sm:$0xff]
  %v280 = vld [vmem:[%s0 + $0x78] sm:$0xff]
  %v281 = vld [vmem:[%s0 + $0x80] sm:$0xf]
  %v282 = vld [vmem:[%s0 + $0x84] sm:$0xff]
  %v283 = vld [vmem:[%s0 + $0x8c] sm:$0xff]
  %v284 = vld [vmem:[%s0 + $0x94] sm:$0xff]
  %v285 = vld [vmem:[%s0 + $0x9c] sm:$0xff]
  %v286 = vld [vmem:[%s0 + $0xa4] sm:$0xff]
  %v287 = vld [vmem:[%s0 + $0xac] sm:$0xf]
  %v288 = vld [vmem:[%s0 + $0xb0] sm:$0xff]
  %v289 = vld [vmem:[%s0 + $0xb8] sm:$0xff]
  %v290 = vld [vmem:[%s0 + $0xc0] sm:$0xff]
  %v291 = vld [vmem:[%s0 + $0xc8] sm:$0xff]
  %v292 = vld [vmem:[%s0 + $0xd0] sm:$0xff]
  %v293 = vld [vmem:[%s0 + $0xd8] sm:$0xf]
  %v294 = vld [vmem:[%s0 + $0xdc] sm:$0xff]
  %v295 = vld [vmem:[%s0 + $0xe4] sm:$0xff]
  %v296 = vld [vmem:[%s0 + $0xec] sm:$0xff]
  %v297 = vld [vmem:[%s0 + $0xf4] sm:$0xff]
  %v298 = vld [vmem:[%s0 + $0xfc] sm:$0xff]
  %v299 = vld [vmem:[%s0 + $0x104] sm:$0xf]
  %v300 = vld [vmem:[%s0 + $0x108] sm:$0xff]
  %v301 = vld [vmem:[%s0 + $0x110] sm:$0xff]
  %v302 = vld [vmem:[%s0 + $0x118] sm:$0xff]
  %v303 = vld [vmem:[%s0 + $0x120] sm:$0xff]
  %v304 = vld [vmem:[%s0 + $0x128] sm:$0xff]
  %v305 = vld [vmem:[%s0 + $0x130] sm:$0xf]
  %v306 = vld [vmem:[%s0 + $0x134] sm:$0xff]
  %v307 = vld [vmem:[%s0 + $0x13c] sm:$0xff]
  %v308 = vld [vmem:[%s0 + $0x144] sm:$0xff]
  %v309 = vld [vmem:[%s0 + $0x14c] sm:$0xff]
  %v310 = vld [vmem:[%s0 + $0x154] sm:$0xff]
  %v311 = vld [vmem:[%s0 + $0x15c] sm:$0xf]
  %v312 = vld [vmem:[%s0 + $0x160] sm:$0xff]
  %v313 = vld [vmem:[%s0 + $0x168] sm:$0xff]
  %v314 = vld [vmem:[%s0 + $0x170] sm:$0xff]
  %v315 = vld [vmem:[%s0 + $0x178] sm:$0xff]
  %v316 = vld [vmem:[%s0 + $0x180] sm:$0xff]
  %v317 = vld [vmem:[%s0 + $0x188] sm:$0xf]
  %v318 = vld [vmem:[%s0 + $0x18c] sm:$0xff]
  %v319 = vld [vmem:[%s0 + $0x194] sm:$0xff]
  %v320 = vld [vmem:[%s0 + $0x19c] sm:$0xff]
  %v321 = vld [vmem:[%s0 + $0x1a4] sm:$0xff]
  %v322 = vld [vmem:[%s0 + $0x1ac] sm:$0xff]
  %v323 = vld [vmem:[%s0 + $0x1b4] sm:$0xf]
  %v324 = vld [vmem:[%s0 + $0x1b8] sm:$0xff]
  %v325 = vld [vmem:[%s0 + $0x1c0] sm:$0xff]
  %v326 = vld [vmem:[%s0 + $0x1c8] sm:$0xff]
  %v327 = vld [vmem:[%s0 + $0x1d0] sm:$0xff]
  %v328 = vld [vmem:[%s0 + $0x1d8] sm:$0xff]
  %v329 = vld [vmem:[%s0 + $0x1e0] sm:$0xf]
  %v330 = vld [vmem:[%s0 + $0x1e4] sm:$0xff]
  %v331 = vld [vmem:[%s0 + $0x1ec] sm:$0xff]
  %v332 = vld [vmem:[%s0 + $0x1f4] sm:$0xff]
  %v333 = vld [vmem:[%s0 + $0x1fc] sm:$0xff]
  %v334 = vld [vmem:[%s0 + $0x204] sm:$0xff]
  %v335 = vld [vmem:[%s0 + $0x20c] sm:$0xf]
  %v336 = vld [vmem:[%s0 + $0x210] sm:$0xff]
  %v337 = vld [vmem:[%s0 + $0x218] sm:$0xff]
  %v338 = vld [vmem:[%s0 + $0x220] sm:$0xff]
  %v339 = vld [vmem:[%s0 + $0x228] sm:$0xff]
  %v340 = vld [vmem:[%s0 + $0x230] sm:$0xff]
  %v341 = vld [vmem:[%s0 + $0x238] sm:$0xf]
  %v342 = vld [vmem:[%s0 + $0x23c] sm:$0xff]
  %v343 = vld [vmem:[%s0 + $0x244] sm:$0xff]
  %v344 = vld [vmem:[%s0 + $0x24c] sm:$0xff]
  %v345 = vld [vmem:[%s0 + $0x254] sm:$0xff]
  %v346 = vld [vmem:[%s0 + $0x25c] sm:$0xff]
  %v347 = vld [vmem:[%s0 + $0x264] sm:$0xf]
  %v348 = vld [vmem:[%s0 + $0x268] sm:$0xff]
  %v349 = vld [vmem:[%s0 + $0x270] sm:$0xff]
  %v350 = vld [vmem:[%s0 + $0x278] sm:$0xff]
  %v351 = vld [vmem:[%s0 + $0x280] sm:$0xff]
  %v352 = vld [vmem:[%s0 + $0x288] sm:$0xff]
  %v353 = vld [vmem:[%s0 + $0x290] sm:$0xf]
  %v354 = vld [vmem:[%s0 + $0x294] sm:$0xff]
  %v355 = vld [vmem:[%s0 + $0x29c] sm:$0xff]
  %v356 = vld [vmem:[%s0 + $0x2a4] sm:$0xff]
  %v357 = vld [vmem:[%s0 + $0x2ac] sm:$0xff]
  %v358 = vld [vmem:[%s0 + $0x2b4] sm:$0xff]
  %v359 = vld [vmem:[%s0 + $0x2bc] sm:$0xf]
  %v456 = vunpack.c.l.b16 %v264
  %v457 = vunpack.c.h.b16 %v264
  %v458 = vunpack.c.l.b16 %v265
  %v459 = vunpack.c.h.b16 %v265
  %v460 = vunpack.c.l.b16 %v266
  %v461 = vunpack.c.h.b16 %v266
  %v462 = vunpack.c.l.b16 %v267
  %v463 = vunpack.c.h.b16 %v267
  %v464 = vunpack.c.l.b16 %v268
  %v465 = vunpack.c.h.b16 %v268
  %v466 = vunpack.c.l.b16 %v269
  %v467 = vunpack.c.l.b16 %v270
  %v468 = vunpack.c.h.b16 %v270
  %v469 = vunpack.c.l.b16 %v271
  %v470 = vunpack.c.h.b16 %v271
  %v471 = vunpack.c.l.b16 %v272
  %v472 = vunpack.c.h.b16 %v272
  %v473 = vunpack.c.l.b16 %v273
  %v474 = vunpack.c.h.b16 %v273
  %v475 = vunpack.c.l.b16 %v274
  %v476 = vunpack.c.h.b16 %v274
  %v477 = vunpack.c.l.b16 %v275
  %v478 = vunpack.c.l.b16 %v276
  %v479 = vunpack.c.h.b16 %v276
  %v480 = vunpack.c.l.b16 %v277
  %v481 = vunpack.c.h.b16 %v277
  %v482 = vunpack.c.l.b16 %v278
  %v483 = vunpack.c.h.b16 %v278
  %v484 = vunpack.c.l.b16 %v279
  %v485 = vunpack.c.h.b16 %v279
  %v486 = vunpack.c.l.b16 %v280
  %v487 = vunpack.c.h.b16 %v280
  %v488 = vunpack.c.l.b16 %v281
  %v489 = vunpack.c.l.b16 %v282
  %v490 = vunpack.c.h.b16 %v282
  %v491 = vunpack.c.l.b16 %v283
  %v492 = vunpack.c.h.b16 %v283
  %v493 = vunpack.c.l.b16 %v284
  %v494 = vunpack.c.h.b16 %v284
  %v495 = vunpack.c.l.b16 %v285
  %v496 = vunpack.c.h.b16 %v285
  %v497 = vunpack.c.l.b16 %v286
  %v498 = vunpack.c.h.b16 %v286
  %v499 = vunpack.c.l.b16 %v287
  %v500 = vunpack.c.l.b16 %v288
  %v501 = vunpack.c.h.b16 %v288
  %v502 = vunpack.c.l.b16 %v289
  %v503 = vunpack.c.h.b16 %v289
  %v504 = vunpack.c.l.b16 %v290
  %v505 = vunpack.c.h.b16 %v290
  %v506 = vunpack.c.l.b16 %v291
  %v507 = vunpack.c.h.b16 %v291
  %v508 = vunpack.c.l.b16 %v292
  %v509 = vunpack.c.h.b16 %v292
  %v510 = vunpack.c.l.b16 %v293
  %v511 = vunpack.c.l.b16 %v294
  %v512 = vunpack.c.h.b16 %v294
  %v513 = vunpack.c.l.b16 %v295
  %v514 = vunpack.c.h.b16 %v295
  %v515 = vunpack.c.l.b16 %v296
  %v516 = vunpack.c.h.b16 %v296
  %v517 = vunpack.c.l.b16 %v297
  %v518 = vunpack.c.h.b16 %v297
  %v519 = vunpack.c.l.b16 %v298
  %v520 = vunpack.c.h.b16 %v298
  %v521 = vunpack.c.l.b16 %v299
  %v522 = vunpack.c.l.b16 %v300
  %v523 = vunpack.c.h.b16 %v300
  %v524 = vunpack.c.l.b16 %v301
  %v525 = vunpack.c.h.b16 %v301
  %v526 = vunpack.c.l.b16 %v302
  %v527 = vunpack.c.h.b16 %v302
  %v528 = vunpack.c.l.b16 %v303
  %v529 = vunpack.c.h.b16 %v303
  %v530 = vunpack.c.l.b16 %v304
  %v531 = vunpack.c.h.b16 %v304
  %v532 = vunpack.c.l.b16 %v305
  %v533 = vunpack.c.l.b16 %v306
  %v534 = vunpack.c.h.b16 %v306
  %v535 = vunpack.c.l.b16 %v307
  %v536 = vunpack.c.h.b16 %v307
  %v537 = vunpack.c.l.b16 %v308
  %v538 = vunpack.c.h.b16 %v308
  %v539 = vunpack.c.l.b16 %v309
  %v540 = vunpack.c.h.b16 %v309
  %v541 = vunpack.c.l.b16 %v310
  %v542 = vunpack.c.h.b16 %v310
  %v543 = vunpack.c.l.b16 %v311
  %v544 = vunpack.c.l.b16 %v312
  %v545 = vunpack.c.h.b16 %v312
  %v546 = vunpack.c.l.b16 %v313
  %v547 = vunpack.c.h.b16 %v313
  %v548 = vunpack.c.l.b16 %v314
  %v549 = vunpack.c.h.b16 %v314
  %v550 = vunpack.c.l.b16 %v315
  %v551 = vunpack.c.h.b16 %v315
  %v552 = vunpack.c.l.b16 %v316
  %v553 = vunpack.c.h.b16 %v316
  %v554 = vunpack.c.l.b16 %v317
  %v555 = vunpack.c.l.b16 %v318
  %v556 = vunpack.c.h.b16 %v318
  %v557 = vunpack.c.l.b16 %v319
  %v558 = vunpack.c.h.b16 %v319
  %v559 = vunpack.c.l.b16 %v320
  %v560 = vunpack.c.h.b16 %v320
  %v561 = vunpack.c.l.b16 %v321
  %v562 = vunpack.c.h.b16 %v321
  %v563 = vunpack.c.l.b16 %v322
  %v564 = vunpack.c.h.b16 %v322
  %v565 = vunpack.c.l.b16 %v323
  %v566 = vunpack.c.l.b16 %v324
  %v567 = vunpack.c.h.b16 %v324
  %v568 = vunpack.c.l.b16 %v325
  %v569 = vunpack.c.h.b16 %v325
  %v570 = vunpack.c.l.b16 %v326
  %v571 = vunpack.c.h.b16 %v326
  %v572 = vunpack.c.l.b16 %v327
  %v573 = vunpack.c.h.b16 %v327
  %v574 = vunpack.c.l.b16 %v328
  %v575 = vunpack.c.h.b16 %v328
  %v576 = vunpack.c.l.b16 %v329
  %v577 = vunpack.c.l.b16 %v330
  %v578 = vunpack.c.h.b16 %v330
  %v579 = vunpack.c.l.b16 %v331
  %v580 = vunpack.c.h.b16 %v331
  %v581 = vunpack.c.l.b16 %v332
  %v582 = vunpack.c.h.b16 %v332
  %v583 = vunpack.c.l.b16 %v333
  %v584 = vunpack.c.h.b16 %v333
  %v585 = vunpack.c.l.b16 %v334
  %v586 = vunpack.c.h.b16 %v334
  %v587 = vunpack.c.l.b16 %v335
  %v588 = vunpack.c.l.b16 %v336
  %v589 = vunpack.c.h.b16 %v336
  %v590 = vunpack.c.l.b16 %v337
  %v591 = vunpack.c.h.b16 %v337
  %v592 = vunpack.c.l.b16 %v338
  %v593 = vunpack.c.h.b16 %v338
  %v594 = vunpack.c.l.b16 %v339
  %v595 = vunpack.c.h.b16 %v339
  %v596 = vunpack.c.l.b16 %v340
  %v597 = vunpack.c.h.b16 %v340
  %v598 = vunpack.c.l.b16 %v341
  %v599 = vunpack.c.l.b16 %v342
  %v600 = vunpack.c.h.b16 %v342
  %v601 = vunpack.c.l.b16 %v343
  %v602 = vunpack.c.h.b16 %v343
  %v603 = vunpack.c.l.b16 %v344
  %v604 = vunpack.c.h.b16 %v344
  %v605 = vunpack.c.l.b16 %v345
  %v606 = vunpack.c.h.b16 %v345
  %v607 = vunpack.c.l.b16 %v346
  %v608 = vunpack.c.h.b16 %v346
  %v609 = vunpack.c.l.b16 %v347
  %v610 = vunpack.c.l.b16 %v348
  %v611 = vunpack.c.h.b16 %v348
  %v612 = vunpack.c.l.b16 %v349
  %v613 = vunpack.c.h.b16 %v349
  %v614 = vunpack.c.l.b16 %v350
  %v615 = vunpack.c.h.b16 %v350
  %v616 = vunpack.c.l.b16 %v351
  %v617 = vunpack.c.h.b16 %v351
  %v618 = vunpack.c.l.b16 %v352
  %v619 = vunpack.c.h.b16 %v352
  %v620 = vunpack.c.l.b16 %v353
  %v621 = vunpack.c.l.b16 %v354
  %v622 = vunpack.c.h.b16 %v354
  %v623 = vunpack.c.l.b16 %v355
  %v624 = vunpack.c.h.b16 %v355
  %v625 = vunpack.c.l.b16 %v356
  %v626 = vunpack.c.h.b16 %v356
  %v627 = vunpack.c.l.b16 %v357
  %v628 = vunpack.c.h.b16 %v357
  %v629 = vunpack.c.l.b16 %v358
  %v630 = vunpack.c.h.b16 %v358
  %v631 = vunpack.c.l.b16 %v359
  %v632 = vpack.c.b16 %v467, %v456
  %v633 = vpack.c.b16 %v468, %v457
  %v634 = vpack.c.b16 %v469, %v458
  %v635 = vpack.c.b16 %v470, %v459
  %v636 = vpack.c.b16 %v471, %v460
  %v637 = vpack.c.b16 %v472, %v461
  %v638 = vpack.c.b16 %v473, %v462
  %v639 = vpack.c.b16 %v474, %v463
  %v640 = vpack.c.b16 %v475, %v464
  %v641 = vpack.c.b16 %v476, %v465
  %v642 = vpack.c.b16 %v477, %v466
  %v643 = vpack.c.b16 %v489, %v478
  %v644 = vpack.c.b16 %v490, %v479
  %v645 = vpack.c.b16 %v491, %v480
  %v646 = vpack.c.b16 %v492, %v481
  %v647 = vpack.c.b16 %v493, %v482
  %v648 = vpack.c.b16 %v494, %v483
  %v649 = vpack.c.b16 %v495, %v484
  %v650 = vpack.c.b16 %v496, %v485
  %v651 = vpack.c.b16 %v497, %v486
  %v652 = vpack.c.b16 %v498, %v487
  %v653 = vpack.c.b16 %v499, %v488
  %v654 = vpack.c.b16 %v511, %v500
  %v655 = vpack.c.b16 %v512, %v501
  %v656 = vpack.c.b16 %v513, %v502
  %v657 = vpack.c.b16 %v514, %v503
  %v658 = vpack.c.b16 %v515, %v504
  %v659 = vpack.c.b16 %v516, %v505
  %v660 = vpack.c.b16 %v517, %v506
  %v661 = vpack.c.b16 %v518, %v507
  %v662 = vpack.c.b16 %v519, %v508
  %v663 = vpack.c.b16 %v520, %v509
  %v664 = vpack.c.b16 %v521, %v510
  %v665 = vpack.c.b16 %v533, %v522
  %v666 = vpack.c.b16 %v534, %v523
  %v667 = vpack.c.b16 %v535, %v524
  %v668 = vpack.c.b16 %v536, %v525
  %v669 = vpack.c.b16 %v537, %v526
  %v670 = vpack.c.b16 %v538, %v527
  %v671 = vpack.c.b16 %v539, %v528
  %v672 = vpack.c.b16 %v540, %v529
  %v673 = vpack.c.b16 %v541, %v530
  %v674 = vpack.c.b16 %v542, %v531
  %v675 = vpack.c.b16 %v543, %v532
  %v676 = vpack.c.b16 %v555, %v544
  %v677 = vpack.c.b16 %v556, %v545
  %v678 = vpack.c.b16 %v557, %v546
  %v679 = vpack.c.b16 %v558, %v547
  %v680 = vpack.c.b16 %v559, %v548
  %v681 = vpack.c.b16 %v560, %v549
  %v682 = vpack.c.b16 %v561, %v550
  %v683 = vpack.c.b16 %v562, %v551
  %v684 = vpack.c.b16 %v563, %v552
  %v685 = vpack.c.b16 %v564, %v553
  %v686 = vpack.c.b16 %v565, %v554
  %v687 = vpack.c.b16 %v577, %v566
  %v688 = vpack.c.b16 %v578, %v567
  %v689 = vpack.c.b16 %v579, %v568
  %v690 = vpack.c.b16 %v580, %v569
  %v691 = vpack.c.b16 %v581, %v570
  %v692 = vpack.c.b16 %v582, %v571
  %v693 = vpack.c.b16 %v583, %v572
  %v694 = vpack.c.b16 %v584, %v573
  %v695 = vpack.c.b16 %v585, %v574
  %v696 = vpack.c.b16 %v586, %v575
  %v697 = vpack.c.b16 %v587, %v576
  %v698 = vpack.c.b16 %v599, %v588
  %v699 = vpack.c.b16 %v600, %v589
  %v700 = vpack.c.b16 %v601, %v590
  %v701 = vpack.c.b16 %v602, %v591
  %v702 = vpack.c.b16 %v603, %v592
  %v703 = vpack.c.b16 %v604, %v593
  %v704 = vpack.c.b16 %v605, %v594
  %v705 = vpack.c.b16 %v606, %v595
  %v706 = vpack.c.b16 %v607, %v596
  %v707 = vpack.c.b16 %v608, %v597
  %v708 = vpack.c.b16 %v609, %v598
  %v709 = vpack.c.b16 %v621, %v610
  %v710 = vpack.c.b16 %v622, %v611
  %v711 = vpack.c.b16 %v623, %v612
  %v712 = vpack.c.b16 %v624, %v613
  %v713 = vpack.c.b16 %v625, %v614
  %v714 = vpack.c.b16 %v626, %v615
  %v715 = vpack.c.b16 %v627, %v616
  %v716 = vpack.c.b16 %v628, %v617
  %v717 = vpack.c.b16 %v629, %v618
  %v718 = vpack.c.b16 %v630, %v619
  %v719 = vpack.c.b16 %v631, %v620
  %vm800 = vcmask 261120
  %v802 = vsel %vm800, %v642, 0
  %v805 = vsel %vm800, %v653, 0
  %v808 = vsel %vm800, %v664, 0
  %v811 = vsel %vm800, %v675, 0
  %v814 = vsel %vm800, %v686, 0
  %v817 = vsel %vm800, %v697, 0
  %v820 = vsel %vm800, %v708, 0
  %v823 = vsel %vm800, %v719, 0
  %825 = vmatpush.bf16.msra.mxu0 %v189
  %826 = vmatpush.bf16.msra.mxu0 %v188
  %827 = vmatpush.bf16.msra.mxu0 %v187
  %828 = vmatpush.bf16.msra.mxu0 %v186
  %829 = vmatpush.bf16.msra.mxu0 %v185
  %830 = vmatpush.bf16.msra.mxu0 %v184
  %831 = vmatpush.bf16.msra.mxu0 %v183
  %832 = vmatpush.bf16.msra.mxu0 %v182
  %833 = vmatmul.bf16.gmra.mxu0 %v632
  %v834 = vpop.f32.mrf.mxu0
  %v835 = vadd.f32 0.0, %v834
  %v836 = vpop.f32.mrf.mxu0
  %v837 = vadd.f32 0.0, %v836
  %838 = vmatmul.bf16.gmra.mxu0 %v643
  %v839 = vpop.f32.mrf.mxu0
  %v840 = vadd.f32 0.0, %v839
  %v841 = vpop.f32.mrf.mxu0
  %v842 = vadd.f32 0.0, %v841
  %843 = vmatmul.bf16.gmra.mxu0 %v654
  %v844 = vpop.f32.mrf.mxu0
  %v845 = vadd.f32 0.0, %v844
  %v846 = vpop.f32.mrf.mxu0
  %v847 = vadd.f32 0.0, %v846
  %848 = vmatmul.bf16.gmra.mxu0 %v665
  %v849 = vpop.f32.mrf.mxu0
  %v850 = vadd.f32 0.0, %v849
  %v851 = vpop.f32.mrf.mxu0
  %v852 = vadd.f32 0.0, %v851
  %853 = vmatmul.bf16.gmra.mxu0 %v676
  %v854 = vpop.f32.mrf.mxu0
  %v855 = vadd.f32 0.0, %v854
  %v856 = vpop.f32.mrf.mxu0
  %v857 = vadd.f32 0.0, %v856
  %858 = vmatmul.bf16.gmra.mxu0 %v687
  %v859 = vpop.f32.mrf.mxu0
  %v860 = vadd.f32 0.0, %v859
  %v861 = vpop.f32.mrf.mxu0
  %v862 = vadd.f32 0.0, %v861
  %863 = vmatmul.bf16.gmra.mxu0 %v698
  %v864 = vpop.f32.mrf.mxu0
  %v865 = vadd.f32 0.0, %v864
  %v866 = vpop.f32.mrf.mxu0
  %v867 = vadd.f32 0.0, %v866
  %868 = vmatmul.bf16.gmra.mxu0 %v709
  %v869 = vpop.f32.mrf.mxu0
  %v870 = vadd.f32 0.0, %v869
  %v871 = vpop.f32.mrf.mxu0
  %v872 = vadd.f32 0.0, %v871
  %873 = vdwg.mxu0
  %874 = vmatpush.bf16.msra.mxu0 %v197
  %875 = vmatpush.bf16.msra.mxu0 %v196
  %876 = vmatpush.bf16.msra.mxu0 %v195
  %877 = vmatpush.bf16.msra.mxu0 %v194
  %878 = vmatpush.bf16.msra.mxu0 %v193
  %879 = vmatpush.bf16.msra.mxu0 %v192
  %880 = vmatpush.bf16.msra.mxu0 %v191
  %881 = vmatpush.bf16.msra.mxu0 %v190
  %882 = vmatmul.bf16.gmra.mxu0 %v633
  %v883 = vpop.f32.mrf.mxu0
  %v884 = vadd.f32 %v835, %v883
  %v885 = vpop.f32.mrf.mxu0
  %v886 = vadd.f32 %v837, %v885
  %887 = vmatmul.bf16.gmra.mxu0 %v644
  %v888 = vpop.f32.mrf.mxu0
  %v889 = vadd.f32 %v840, %v888
  %v890 = vpop.f32.mrf.mxu0
  %v891 = vadd.f32 %v842, %v890
  %892 = vmatmul.bf16.gmra.mxu0 %v655
  %v893 = vpop.f32.mrf.mxu0
  %v894 = vadd.f32 %v845, %v893
  %v895 = vpop.f32.mrf.mxu0
  %v896 = vadd.f32 %v847, %v895
  %897 = vmatmul.bf16.gmra.mxu0 %v666
  %v898 = vpop.f32.mrf.mxu0
  %v899 = vadd.f32 %v850, %v898
  %v900 = vpop.f32.mrf.mxu0
  %v901 = vadd.f32 %v852, %v900
  %902 = vmatmul.bf16.gmra.mxu0 %v677
  %v903 = vpop.f32.mrf.mxu0
  %v904 = vadd.f32 %v855, %v903
  %v905 = vpop.f32.mrf.mxu0
  %v906 = vadd.f32 %v857, %v905
  %907 = vmatmul.bf16.gmra.mxu0 %v688
  %v908 = vpop.f32.mrf.mxu0
  %v909 = vadd.f32 %v860, %v908
  %v910 = vpop.f32.mrf.mxu0
  %v911 = vadd.f32 %v862, %v910
  %912 = vmatmul.bf16.gmra.mxu0 %v699
  %v913 = vpop.f32.mrf.mxu0
  %v914 = vadd.f32 %v865, %v913
  %v915 = vpop.f32.mrf.mxu0
  %v916 = vadd.f32 %v867, %v915
  %917 = vmatmul.bf16.gmra.mxu0 %v710
  %v918 = vpop.f32.mrf.mxu0
  %v919 = vadd.f32 %v870, %v918
  %v920 = vpop.f32.mrf.mxu0
  %v921 = vadd.f32 %v872, %v920
  %922 = vdwg.mxu0
  %923 = vmatpush.bf16.msra.mxu0 %v205
  %924 = vmatpush.bf16.msra.mxu0 %v204
  %925 = vmatpush.bf16.msra.mxu0 %v203
  %926 = vmatpush.bf16.msra.mxu0 %v202
  %927 = vmatpush.bf16.msra.mxu0 %v201
  %928 = vmatpush.bf16.msra.mxu0 %v200
  %929 = vmatpush.bf16.msra.mxu0 %v199
  %930 = vmatpush.bf16.msra.mxu0 %v198
  %931 = vmatmul.bf16.gmra.mxu0 %v634
  %v932 = vpop.f32.mrf.mxu0
  %v933 = vadd.f32 %v884, %v932
  %v934 = vpop.f32.mrf.mxu0
  %v935 = vadd.f32 %v886, %v934
  %936 = vmatmul.bf16.gmra.mxu0 %v645
  %v937 = vpop.f32.mrf.mxu0
  %v938 = vadd.f32 %v889, %v937
  %v939 = vpop.f32.mrf.mxu0
  %v940 = vadd.f32 %v891, %v939
  %941 = vmatmul.bf16.gmra.mxu0 %v656
  %v942 = vpop.f32.mrf.mxu0
  %v943 = vadd.f32 %v894, %v942
  %v944 = vpop.f32.mrf.mxu0
  %v945 = vadd.f32 %v896, %v944
  %946 = vmatmul.bf16.gmra.mxu0 %v667
  %v947 = vpop.f32.mrf.mxu0
  %v948 = vadd.f32 %v899, %v947
  %v949 = vpop.f32.mrf.mxu0
  %v950 = vadd.f32 %v901, %v949
  %951 = vmatmul.bf16.gmra.mxu0 %v678
  %v952 = vpop.f32.mrf.mxu0
  %v953 = vadd.f32 %v904, %v952
  %v954 = vpop.f32.mrf.mxu0
  %v955 = vadd.f32 %v906, %v954
  %956 = vmatmul.bf16.gmra.mxu0 %v689
  %v957 = vpop.f32.mrf.mxu0
  %v958 = vadd.f32 %v909, %v957
  %v959 = vpop.f32.mrf.mxu0
  %v960 = vadd.f32 %v911, %v959
  %961 = vmatmul.bf16.gmra.mxu0 %v700
  %v962 = vpop.f32.mrf.mxu0
  %v963 = vadd.f32 %v914, %v962
  %v964 = vpop.f32.mrf.mxu0
  %v965 = vadd.f32 %v916, %v964
  %966 = vmatmul.bf16.gmra.mxu0 %v711
  %v967 = vpop.f32.mrf.mxu0
  %v968 = vadd.f32 %v919, %v967
  %v969 = vpop.f32.mrf.mxu0
  %v970 = vadd.f32 %v921, %v969
  %971 = vdwg.mxu0
  %972 = vmatpush.bf16.msra.mxu0 %v213
  %973 = vmatpush.bf16.msra.mxu0 %v212
  %974 = vmatpush.bf16.msra.mxu0 %v211
  %975 = vmatpush.bf16.msra.mxu0 %v210
  %976 = vmatpush.bf16.msra.mxu0 %v209
  %977 = vmatpush.bf16.msra.mxu0 %v208
  %978 = vmatpush.bf16.msra.mxu0 %v207
  %979 = vmatpush.bf16.msra.mxu0 %v206
  %980 = vmatmul.bf16.gmra.mxu0 %v635
  %v981 = vpop.f32.mrf.mxu0
  %v982 = vadd.f32 %v933, %v981
  %v983 = vpop.f32.mrf.mxu0
  %v984 = vadd.f32 %v935, %v983
  %985 = vmatmul.bf16.gmra.mxu0 %v646
  %v986 = vpop.f32.mrf.mxu0
  %v987 = vadd.f32 %v938, %v986
  %v988 = vpop.f32.mrf.mxu0
  %v989 = vadd.f32 %v940, %v988
  %990 = vmatmul.bf16.gmra.mxu0 %v657
  %v991 = vpop.f32.mrf.mxu0
  %v992 = vadd.f32 %v943, %v991
  %v993 = vpop.f32.mrf.mxu0
  %v994 = vadd.f32 %v945, %v993
  %995 = vmatmul.bf16.gmra.mxu0 %v668
  %v996 = vpop.f32.mrf.mxu0
  %v997 = vadd.f32 %v948, %v996
  %v998 = vpop.f32.mrf.mxu0
  %v999 = vadd.f32 %v950, %v998
  %1000 = vmatmul.bf16.gmra.mxu0 %v679
  %v1001 = vpop.f32.mrf.mxu0
  %v1002 = vadd.f32 %v953, %v1001
  %v1003 = vpop.f32.mrf.mxu0
  %v1004 = vadd.f32 %v955, %v1003
  %1005 = vmatmul.bf16.gmra.mxu0 %v690
  %v1006 = vpop.f32.mrf.mxu0
  %v1007 = vadd.f32 %v958, %v1006
  %v1008 = vpop.f32.mrf.mxu0
  %v1009 = vadd.f32 %v960, %v1008
  %1010 = vmatmul.bf16.gmra.mxu0 %v701
  %v1011 = vpop.f32.mrf.mxu0
  %v1012 = vadd.f32 %v963, %v1011
  %v1013 = vpop.f32.mrf.mxu0
  %v1014 = vadd.f32 %v965, %v1013
  %1015 = vmatmul.bf16.gmra.mxu0 %v712
  %v1016 = vpop.f32.mrf.mxu0
  %v1017 = vadd.f32 %v968, %v1016
  %v1018 = vpop.f32.mrf.mxu0
  %v1019 = vadd.f32 %v970, %v1018
  %1020 = vdwg.mxu0
  %1021 = vmatpush.bf16.msra.mxu0 %v221
  %1022 = vmatpush.bf16.msra.mxu0 %v220
  %1023 = vmatpush.bf16.msra.mxu0 %v219
  %1024 = vmatpush.bf16.msra.mxu0 %v218
  %1025 = vmatpush.bf16.msra.mxu0 %v217
  %1026 = vmatpush.bf16.msra.mxu0 %v216
  %1027 = vmatpush.bf16.msra.mxu0 %v215
  %1028 = vmatpush.bf16.msra.mxu0 %v214
  %1029 = vmatmul.bf16.gmra.mxu0 %v636
  %v1030 = vpop.f32.mrf.mxu0
  %v1031 = vadd.f32 %v982, %v1030
  %v1032 = vpop.f32.mrf.mxu0
  %v1033 = vadd.f32 %v984, %v1032
  %1034 = vmatmul.bf16.gmra.mxu0 %v647
  %v1035 = vpop.f32.mrf.mxu0
  %v1036 = vadd.f32 %v987, %v1035
  %v1037 = vpop.f32.mrf.mxu0
  %v1038 = vadd.f32 %v989, %v1037
  %1039 = vmatmul.bf16.gmra.mxu0 %v658
  %v1040 = vpop.f32.mrf.mxu0
  %v1041 = vadd.f32 %v992, %v1040
  %v1042 = vpop.f32.mrf.mxu0
  %v1043 = vadd.f32 %v994, %v1042
  %1044 = vmatmul.bf16.gmra.mxu0 %v669
  %v1045 = vpop.f32.mrf.mxu0
  %v1046 = vadd.f32 %v997, %v1045
  %v1047 = vpop.f32.mrf.mxu0
  %v1048 = vadd.f32 %v999, %v1047
  %1049 = vmatmul.bf16.gmra.mxu0 %v680
  %v1050 = vpop.f32.mrf.mxu0
  %v1051 = vadd.f32 %v1002, %v1050
  %v1052 = vpop.f32.mrf.mxu0
  %v1053 = vadd.f32 %v1004, %v1052
  %1054 = vmatmul.bf16.gmra.mxu0 %v691
  %v1055 = vpop.f32.mrf.mxu0
  %v1056 = vadd.f32 %v1007, %v1055
  %v1057 = vpop.f32.mrf.mxu0
  %v1058 = vadd.f32 %v1009, %v1057
  %1059 = vmatmul.bf16.gmra.mxu0 %v702
  %v1060 = vpop.f32.mrf.mxu0
  %v1061 = vadd.f32 %v1012, %v1060
  %v1062 = vpop.f32.mrf.mxu0
  %v1063 = vadd.f32 %v1014, %v1062
  %1064 = vmatmul.bf16.gmra.mxu0 %v713
  %v1065 = vpop.f32.mrf.mxu0
  %v1066 = vadd.f32 %v1017, %v1065
  %v1067 = vpop.f32.mrf.mxu0
  %v1068 = vadd.f32 %v1019, %v1067
  %1069 = vdwg.mxu0
  %1070 = vmatpush.bf16.msra.mxu0 %v229
  %1071 = vmatpush.bf16.msra.mxu0 %v228
  %1072 = vmatpush.bf16.msra.mxu0 %v227
  %1073 = vmatpush.bf16.msra.mxu0 %v226
  %1074 = vmatpush.bf16.msra.mxu0 %v225
  %1075 = vmatpush.bf16.msra.mxu0 %v224
  %1076 = vmatpush.bf16.msra.mxu0 %v223
  %1077 = vmatpush.bf16.msra.mxu0 %v222
  %1078 = vmatmul.bf16.gmra.mxu0 %v637
  %v1079 = vpop.f32.mrf.mxu0
  %v1080 = vadd.f32 %v1031, %v1079
  %v1081 = vpop.f32.mrf.mxu0
  %v1082 = vadd.f32 %v1033, %v1081
  %1083 = vmatmul.bf16.gmra.mxu0 %v648
  %v1084 = vpop.f32.mrf.mxu0
  %v1085 = vadd.f32 %v1036, %v1084
  %v1086 = vpop.f32.mrf.mxu0
  %v1087 = vadd.f32 %v1038, %v1086
  %1088 = vmatmul.bf16.gmra.mxu0 %v659
  %v1089 = vpop.f32.mrf.mxu0
  %v1090 = vadd.f32 %v1041, %v1089
  %v1091 = vpop.f32.mrf.mxu0
  %v1092 = vadd.f32 %v1043, %v1091
  %1093 = vmatmul.bf16.gmra.mxu0 %v670
  %v1094 = vpop.f32.mrf.mxu0
  %v1095 = vadd.f32 %v1046, %v1094
  %v1096 = vpop.f32.mrf.mxu0
  %v1097 = vadd.f32 %v1048, %v1096
  %1098 = vmatmul.bf16.gmra.mxu0 %v681
  %v1099 = vpop.f32.mrf.mxu0
  %v1100 = vadd.f32 %v1051, %v1099
  %v1101 = vpop.f32.mrf.mxu0
  %v1102 = vadd.f32 %v1053, %v1101
  %1103 = vmatmul.bf16.gmra.mxu0 %v692
  %v1104 = vpop.f32.mrf.mxu0
  %v1105 = vadd.f32 %v1056, %v1104
  %v1106 = vpop.f32.mrf.mxu0
  %v1107 = vadd.f32 %v1058, %v1106
  %1108 = vmatmul.bf16.gmra.mxu0 %v703
  %v1109 = vpop.f32.mrf.mxu0
  %v1110 = vadd.f32 %v1061, %v1109
  %v1111 = vpop.f32.mrf.mxu0
  %v1112 = vadd.f32 %v1063, %v1111
  %1113 = vmatmul.bf16.gmra.mxu0 %v714
  %v1114 = vpop.f32.mrf.mxu0
  %v1115 = vadd.f32 %v1066, %v1114
  %v1116 = vpop.f32.mrf.mxu0
  %v1117 = vadd.f32 %v1068, %v1116
  %1118 = vdwg.mxu0
  %1119 = vmatpush.bf16.msra.mxu0 %v237
  %1120 = vmatpush.bf16.msra.mxu0 %v236
  %1121 = vmatpush.bf16.msra.mxu0 %v235
  %1122 = vmatpush.bf16.msra.mxu0 %v234
  %1123 = vmatpush.bf16.msra.mxu0 %v233
  %1124 = vmatpush.bf16.msra.mxu0 %v232
  %1125 = vmatpush.bf16.msra.mxu0 %v231
  %1126 = vmatpush.bf16.msra.mxu0 %v230
  %1127 = vmatmul.bf16.gmra.mxu0 %v638
  %v1128 = vpop.f32.mrf.mxu0
  %v1129 = vadd.f32 %v1080, %v1128
  %v1130 = vpop.f32.mrf.mxu0
  %v1131 = vadd.f32 %v1082, %v1130
  %1132 = vmatmul.bf16.gmra.mxu0 %v649
  %v1133 = vpop.f32.mrf.mxu0
  %v1134 = vadd.f32 %v1085, %v1133
  %v1135 = vpop.f32.mrf.mxu0
  %v1136 = vadd.f32 %v1087, %v1135
  %1137 = vmatmul.bf16.gmra.mxu0 %v660
  %v1138 = vpop.f32.mrf.mxu0
  %v1139 = vadd.f32 %v1090, %v1138
  %v1140 = vpop.f32.mrf.mxu0
  %v1141 = vadd.f32 %v1092, %v1140
  %1142 = vmatmul.bf16.gmra.mxu0 %v671
  %v1143 = vpop.f32.mrf.mxu0
  %v1144 = vadd.f32 %v1095, %v1143
  %v1145 = vpop.f32.mrf.mxu0
  %v1146 = vadd.f32 %v1097, %v1145
  %1147 = vmatmul.bf16.gmra.mxu0 %v682
  %v1148 = vpop.f32.mrf.mxu0
  %v1149 = vadd.f32 %v1100, %v1148
  %v1150 = vpop.f32.mrf.mxu0
  %v1151 = vadd.f32 %v1102, %v1150
  %1152 = vmatmul.bf16.gmra.mxu0 %v693
  %v1153 = vpop.f32.mrf.mxu0
  %v1154 = vadd.f32 %v1105, %v1153
  %v1155 = vpop.f32.mrf.mxu0
  %v1156 = vadd.f32 %v1107, %v1155
  %1157 = vmatmul.bf16.gmra.mxu0 %v704
  %v1158 = vpop.f32.mrf.mxu0
  %v1159 = vadd.f32 %v1110, %v1158
  %v1160 = vpop.f32.mrf.mxu0
  %v1161 = vadd.f32 %v1112, %v1160
  %1162 = vmatmul.bf16.gmra.mxu0 %v715
  %v1163 = vpop.f32.mrf.mxu0
  %v1164 = vadd.f32 %v1115, %v1163
  %v1165 = vpop.f32.mrf.mxu0
  %v1166 = vadd.f32 %v1117, %v1165
  %1167 = vdwg.mxu0
  %1168 = vmatpush.bf16.msra.mxu0 %v245
  %1169 = vmatpush.bf16.msra.mxu0 %v244
  %1170 = vmatpush.bf16.msra.mxu0 %v243
  %1171 = vmatpush.bf16.msra.mxu0 %v242
  %1172 = vmatpush.bf16.msra.mxu0 %v241
  %1173 = vmatpush.bf16.msra.mxu0 %v240
  %1174 = vmatpush.bf16.msra.mxu0 %v239
  %1175 = vmatpush.bf16.msra.mxu0 %v238
  %1176 = vmatmul.bf16.gmra.mxu0 %v639
  %v1177 = vpop.f32.mrf.mxu0
  %v1178 = vadd.f32 %v1129, %v1177
  %v1179 = vpop.f32.mrf.mxu0
  %v1180 = vadd.f32 %v1131, %v1179
  %1181 = vmatmul.bf16.gmra.mxu0 %v650
  %v1182 = vpop.f32.mrf.mxu0
  %v1183 = vadd.f32 %v1134, %v1182
  %v1184 = vpop.f32.mrf.mxu0
  %v1185 = vadd.f32 %v1136, %v1184
  %1186 = vmatmul.bf16.gmra.mxu0 %v661
  %v1187 = vpop.f32.mrf.mxu0
  %v1188 = vadd.f32 %v1139, %v1187
  %v1189 = vpop.f32.mrf.mxu0
  %v1190 = vadd.f32 %v1141, %v1189
  %1191 = vmatmul.bf16.gmra.mxu0 %v672
  %v1192 = vpop.f32.mrf.mxu0
  %v1193 = vadd.f32 %v1144, %v1192
  %v1194 = vpop.f32.mrf.mxu0
  %v1195 = vadd.f32 %v1146, %v1194
  %1196 = vmatmul.bf16.gmra.mxu0 %v683
  %v1197 = vpop.f32.mrf.mxu0
  %v1198 = vadd.f32 %v1149, %v1197
  %v1199 = vpop.f32.mrf.mxu0
  %v1200 = vadd.f32 %v1151, %v1199
  %1201 = vmatmul.bf16.gmra.mxu0 %v694
  %v1202 = vpop.f32.mrf.mxu0
  %v1203 = vadd.f32 %v1154, %v1202
  %v1204 = vpop.f32.mrf.mxu0
  %v1205 = vadd.f32 %v1156, %v1204
  %1206 = vmatmul.bf16.gmra.mxu0 %v705
  %v1207 = vpop.f32.mrf.mxu0
  %v1208 = vadd.f32 %v1159, %v1207
  %v1209 = vpop.f32.mrf.mxu0
  %v1210 = vadd.f32 %v1161, %v1209
  %1211 = vmatmul.bf16.gmra.mxu0 %v716
  %v1212 = vpop.f32.mrf.mxu0
  %v1213 = vadd.f32 %v1164, %v1212
  %v1214 = vpop.f32.mrf.mxu0
  %v1215 = vadd.f32 %v1166, %v1214
  %1216 = vdwg.mxu0
  %1217 = vmatpush.bf16.msra.mxu0 %v253
  %1218 = vmatpush.bf16.msra.mxu0 %v252
  %1219 = vmatpush.bf16.msra.mxu0 %v251
  %1220 = vmatpush.bf16.msra.mxu0 %v250
  %1221 = vmatpush.bf16.msra.mxu0 %v249
  %1222 = vmatpush.bf16.msra.mxu0 %v248
  %1223 = vmatpush.bf16.msra.mxu0 %v247
  %1224 = vmatpush.bf16.msra.mxu0 %v246
  %1225 = vmatmul.bf16.gmra.mxu0 %v640
  %v1226 = vpop.f32.mrf.mxu0
  %v1227 = vadd.f32 %v1178, %v1226
  %v1228 = vpop.f32.mrf.mxu0
  %v1229 = vadd.f32 %v1180, %v1228
  %1230 = vmatmul.bf16.gmra.mxu0 %v651
  %v1231 = vpop.f32.mrf.mxu0
  %v1232 = vadd.f32 %v1183, %v1231
  %v1233 = vpop.f32.mrf.mxu0
  %v1234 = vadd.f32 %v1185, %v1233
  %1235 = vmatmul.bf16.gmra.mxu0 %v662
  %v1236 = vpop.f32.mrf.mxu0
  %v1237 = vadd.f32 %v1188, %v1236
  %v1238 = vpop.f32.mrf.mxu0
  %v1239 = vadd.f32 %v1190, %v1238
  %1240 = vmatmul.bf16.gmra.mxu0 %v673
  %v1241 = vpop.f32.mrf.mxu0
  %v1242 = vadd.f32 %v1193, %v1241
  %v1243 = vpop.f32.mrf.mxu0
  %v1244 = vadd.f32 %v1195, %v1243
  %1245 = vmatmul.bf16.gmra.mxu0 %v684
  %v1246 = vpop.f32.mrf.mxu0
  %v1247 = vadd.f32 %v1198, %v1246
  %v1248 = vpop.f32.mrf.mxu0
  %v1249 = vadd.f32 %v1200, %v1248
  %1250 = vmatmul.bf16.gmra.mxu0 %v695
  %v1251 = vpop.f32.mrf.mxu0
  %v1252 = vadd.f32 %v1203, %v1251
  %v1253 = vpop.f32.mrf.mxu0
  %v1254 = vadd.f32 %v1205, %v1253
  %1255 = vmatmul.bf16.gmra.mxu0 %v706
  %v1256 = vpop.f32.mrf.mxu0
  %v1257 = vadd.f32 %v1208, %v1256
  %v1258 = vpop.f32.mrf.mxu0
  %v1259 = vadd.f32 %v1210, %v1258
  %1260 = vmatmul.bf16.gmra.mxu0 %v717
  %v1261 = vpop.f32.mrf.mxu0
  %v1262 = vadd.f32 %v1213, %v1261
  %v1263 = vpop.f32.mrf.mxu0
  %v1264 = vadd.f32 %v1215, %v1263
  %1265 = vdwg.mxu0
  %1266 = vmatpush.bf16.msra.mxu0 %v261
  %1267 = vmatpush.bf16.msra.mxu0 %v260
  %1268 = vmatpush.bf16.msra.mxu0 %v259
  %1269 = vmatpush.bf16.msra.mxu0 %v258
  %1270 = vmatpush.bf16.msra.mxu0 %v257
  %1271 = vmatpush.bf16.msra.mxu0 %v256
  %1272 = vmatpush.bf16.msra.mxu0 %v255
  %1273 = vmatpush.bf16.msra.mxu0 %v254
  %1274 = vmatmul.bf16.gmra.mxu0 %v641
  %v1275 = vpop.f32.mrf.mxu0
  %v1276 = vadd.f32 %v1227, %v1275
  %v1277 = vpop.f32.mrf.mxu0
  %v1278 = vadd.f32 %v1229, %v1277
  %1279 = vmatmul.bf16.gmra.mxu0 %v652
  %v1280 = vpop.f32.mrf.mxu0
  %v1281 = vadd.f32 %v1232, %v1280
  %v1282 = vpop.f32.mrf.mxu0
  %v1283 = vadd.f32 %v1234, %v1282
  %1284 = vmatmul.bf16.gmra.mxu0 %v663
  %v1285 = vpop.f32.mrf.mxu0
  %v1286 = vadd.f32 %v1237, %v1285
  %v1287 = vpop.f32.mrf.mxu0
  %v1288 = vadd.f32 %v1239, %v1287
  %1289 = vmatmul.bf16.gmra.mxu0 %v674
  %v1290 = vpop.f32.mrf.mxu0
  %v1291 = vadd.f32 %v1242, %v1290
  %v1292 = vpop.f32.mrf.mxu0
  %v1293 = vadd.f32 %v1244, %v1292
  %1294 = vmatmul.bf16.gmra.mxu0 %v685
  %v1295 = vpop.f32.mrf.mxu0
  %v1296 = vadd.f32 %v1247, %v1295
  %v1297 = vpop.f32.mrf.mxu0
  %v1298 = vadd.f32 %v1249, %v1297
  %1299 = vmatmul.bf16.gmra.mxu0 %v696
  %v1300 = vpop.f32.mrf.mxu0
  %v1301 = vadd.f32 %v1252, %v1300
  %v1302 = vpop.f32.mrf.mxu0
  %v1303 = vadd.f32 %v1254, %v1302
  %1304 = vmatmul.bf16.gmra.mxu0 %v707
  %v1305 = vpop.f32.mrf.mxu0
  %v1306 = vadd.f32 %v1257, %v1305
  %v1307 = vpop.f32.mrf.mxu0
  %v1308 = vadd.f32 %v1259, %v1307
  %1309 = vmatmul.bf16.gmra.mxu0 %v718
  %v1310 = vpop.f32.mrf.mxu0
  %v1311 = vadd.f32 %v1262, %v1310
  %v1312 = vpop.f32.mrf.mxu0
  %v1313 = vadd.f32 %v1264, %v1312
  %1314 = vdwg.mxu0
  %1315 = vmatpush.bf16.msra.mxu0 0
  %1316 = vmatpush.bf16.msra.mxu0 0
  %1317 = vmatpush.bf16.msra.mxu0 0
  %1318 = vmatpush.bf16.msra.mxu0 0
  %1319 = vmatpush.bf16.msra.mxu0 0
  %1320 = vmatpush.bf16.msra.mxu0 0
  %1321 = vmatpush.bf16.msra.mxu0 %v263
  %1322 = vmatpush.bf16.msra.mxu0 %v262
  %1323 = vmatmul.bf16.gmra.mxu0 %v802
  %v1324 = vpop.f32.mrf.mxu0
  %v1325 = vadd.f32 %v1276, %v1324
  %v1326 = vpop.f32.mrf.mxu0
  %v1327 = vadd.f32 %v1278, %v1326
  %1328 = vmatmul.bf16.gmra.mxu0 %v805
  %v1329 = vpop.f32.mrf.mxu0
  %v1330 = vadd.f32 %v1281, %v1329
  %v1331 = vpop.f32.mrf.mxu0
  %v1332 = vadd.f32 %v1283, %v1331
  %1333 = vmatmul.bf16.gmra.mxu0 %v808
  %v1334 = vpop.f32.mrf.mxu0
  %v1335 = vadd.f32 %v1286, %v1334
  %v1336 = vpop.f32.mrf.mxu0
  %v1337 = vadd.f32 %v1288, %v1336
  %1338 = vmatmul.bf16.gmra.mxu0 %v811
  %v1339 = vpop.f32.mrf.mxu0
  %v1340 = vadd.f32 %v1291, %v1339
  %v1341 = vpop.f32.mrf.mxu0
  %v1342 = vadd.f32 %v1293, %v1341
  %1343 = vmatmul.bf16.gmra.mxu0 %v814
  %v1344 = vpop.f32.mrf.mxu0
  %v1345 = vadd.f32 %v1296, %v1344
  %v1346 = vpop.f32.mrf.mxu0
  %v1347 = vadd.f32 %v1298, %v1346
  %1348 = vmatmul.bf16.gmra.mxu0 %v817
  %v1349 = vpop.f32.mrf.mxu0
  %v1350 = vadd.f32 %v1301, %v1349
  %v1351 = vpop.f32.mrf.mxu0
  %v1352 = vadd.f32 %v1303, %v1351
  %1353 = vmatmul.bf16.gmra.mxu0 %v820
  %v1354 = vpop.f32.mrf.mxu0
  %v1355 = vadd.f32 %v1306, %v1354
  %v1356 = vpop.f32.mrf.mxu0
  %v1357 = vadd.f32 %v1308, %v1356
  %1358 = vmatmul.bf16.gmra.mxu0 %v823
  %v1359 = vpop.f32.mrf.mxu0
  %v1360 = vadd.f32 %v1311, %v1359
  %v1361 = vpop.f32.mrf.mxu0
  %v1362 = vadd.f32 %v1313, %v1361
  %1363 = vdwg.mxu0
  %vm1364 = vcmask 400384
  %v1365 = vsel %vm1364, %v1325, 0.0
  %1366 = vadd.xlane.f32.xlu0 %v1365
  %v1367 = vpop.xlane.xlu0 %1366
  %v1368 = vsel %vm1364, %v1327, 0.0
  %1369 = vadd.xlane.f32.xlu0 %v1368
  %v1370 = vpop.xlane.xlu0 %1369
  %v1371 = vsel %vm1364, %v1330, 0.0
  %1372 = vadd.xlane.f32.xlu0 %v1371
  %v1373 = vpop.xlane.xlu0 %1372
  %v1374 = vsel %vm1364, %v1332, 0.0
  %1375 = vadd.xlane.f32.xlu0 %v1374
  %v1376 = vpop.xlane.xlu0 %1375
  %v1377 = vsel %vm1364, %v1335, 0.0
  %1378 = vadd.xlane.f32.xlu0 %v1377
  %v1379 = vpop.xlane.xlu0 %1378
  %v1380 = vsel %vm1364, %v1337, 0.0
  %1381 = vadd.xlane.f32.xlu0 %v1380
  %v1382 = vpop.xlane.xlu0 %1381
  %v1383 = vsel %vm1364, %v1340, 0.0
  %1384 = vadd.xlane.f32.xlu0 %v1383
  %v1385 = vpop.xlane.xlu0 %1384
  %v1386 = vsel %vm1364, %v1342, 0.0
  %1387 = vadd.xlane.f32.xlu0 %v1386
  %v1388 = vpop.xlane.xlu0 %1387
  %v1389 = vsel %vm1364, %v1345, 0.0
  %1390 = vadd.xlane.f32.xlu0 %v1389
  %v1391 = vpop.xlane.xlu0 %1390
  %v1392 = vsel %vm1364, %v1347, 0.0
  %1393 = vadd.xlane.f32.xlu0 %v1392
  %v1394 = vpop.xlane.xlu0 %1393
  %v1395 = vsel %vm1364, %v1350, 0.0
  %1396 = vadd.xlane.f32.xlu0 %v1395
  %v1397 = vpop.xlane.xlu0 %1396
  %v1398 = vsel %vm1364, %v1352, 0.0
  %1399 = vadd.xlane.f32.xlu0 %v1398
  %v1400 = vpop.xlane.xlu0 %1399
  %v1401 = vsel %vm1364, %v1355, 0.0
  %1402 = vadd.xlane.f32.xlu0 %v1401
  %v1403 = vpop.xlane.xlu0 %1402
  %v1404 = vsel %vm1364, %v1357, 0.0
  %1405 = vadd.xlane.f32.xlu0 %v1404
  %v1406 = vpop.xlane.xlu0 %1405
  %v1407 = vsel %vm1364, %v1360, 0.0
  %1408 = vadd.xlane.f32.xlu0 %v1407
  %v1409 = vpop.xlane.xlu0 %1408
  %v1410 = vsel %vm1364, %v1362, 0.0
  %1411 = vadd.xlane.f32.xlu0 %v1410
  %v1412 = vpop.xlane.xlu0 %1411
  %v1413 = vrcp.pop 49.0
  %v1414 = vmul.f32 49.0, %v1413
  %v1415 = vsub.f32 1.0, %v1414
  %v1416 = vmul.f32 %v1413, %v1415
  %v1417 = vadd.f32 %v1413, %v1416
  %vm1418 = vweird.f32 %v1413
  %v1419 = vsel %vm1418, %v1413, %v1417
  %v1420 = vmul.f32 %v1367, %v1419
  %v1421 = vmul.f32 %v1370, %v1419
  %v1422 = vmul.f32 %v1373, %v1419
  %v1423 = vmul.f32 %v1376, %v1419
  %v1424 = vmul.f32 %v1379, %v1419
  %v1425 = vmul.f32 %v1382, %v1419
  %v1426 = vmul.f32 %v1385, %v1419
  %v1427 = vmul.f32 %v1388, %v1419
  %v1428 = vmul.f32 %v1391, %v1419
  %v1429 = vmul.f32 %v1394, %v1419
  %v1430 = vmul.f32 %v1397, %v1419
  %v1431 = vmul.f32 %v1400, %v1419
  %v1432 = vmul.f32 %v1403, %v1419
  %v1433 = vmul.f32 %v1406, %v1419
  %v1434 = vmul.f32 %v1409, %v1419
  %v1435 = vmul.f32 %v1412, %v1419
  %v1436 = vsub.f32 %v1325, %v1420
  %v1437 = vsub.f32 %v1327, %v1421
  %v1438 = vsub.f32 %v1330, %v1422
  %v1439 = vsub.f32 %v1332, %v1423
  %v1440 = vsub.f32 %v1335, %v1424
  %v1441 = vsub.f32 %v1337, %v1425
  %v1442 = vsub.f32 %v1340, %v1426
  %v1443 = vsub.f32 %v1342, %v1427
  %v1444 = vsub.f32 %v1345, %v1428
  %v1445 = vsub.f32 %v1347, %v1429
  %v1446 = vsub.f32 %v1350, %v1430
  %v1447 = vsub.f32 %v1352, %v1431
  %v1448 = vsub.f32 %v1355, %v1432
  %v1449 = vsub.f32 %v1357, %v1433
  %v1450 = vsub.f32 %v1360, %v1434
  %v1451 = vsub.f32 %v1362, %v1435
  %v1452 = vmul.f32 %v1436, %v1436
  %v1453 = vmul.f32 %v1437, %v1437
  %v1454 = vmul.f32 %v1438, %v1438
  %v1455 = vmul.f32 %v1439, %v1439
  %v1456 = vmul.f32 %v1440, %v1440
  %v1457 = vmul.f32 %v1441, %v1441
  %v1458 = vmul.f32 %v1442, %v1442
  %v1459 = vmul.f32 %v1443, %v1443
  %v1460 = vmul.f32 %v1444, %v1444
  %v1461 = vmul.f32 %v1445, %v1445
  %v1462 = vmul.f32 %v1446, %v1446
  %v1463 = vmul.f32 %v1447, %v1447
  %v1464 = vmul.f32 %v1448, %v1448
  %v1465 = vmul.f32 %v1449, %v1449
  %v1466 = vmul.f32 %v1450, %v1450
  %v1467 = vmul.f32 %v1451, %v1451
  %v1468 = vsel %vm1364, %v1452, 0.0
  %1469 = vadd.xlane.f32.xlu0 %v1468
  %v1470 = vpop.xlane.xlu0 %1469
  %v1471 = vsel %vm1364, %v1453, 0.0
  %1472 = vadd.xlane.f32.xlu0 %v1471
  %v1473 = vpop.xlane.xlu0 %1472
  %v1474 = vsel %vm1364, %v1454, 0.0
  %1475 = vadd.xlane.f32.xlu0 %v1474
  %v1476 = vpop.xlane.xlu0 %1475
  %v1477 = vsel %vm1364, %v1455, 0.0
  %1478 = vadd.xlane.f32.xlu0 %v1477
  %v1479 = vpop.xlane.xlu0 %1478
  %v1480 = vsel %vm1364, %v1456, 0.0
  %1481 = vadd.xlane.f32.xlu0 %v1480
  %v1482 = vpop.xlane.xlu0 %1481
  %v1483 = vsel %vm1364, %v1457, 0.0
  %1484 = vadd.xlane.f32.xlu0 %v1483
  %v1485 = vpop.xlane.xlu0 %1484
  %v1486 = vsel %vm1364, %v1458, 0.0
  %1487 = vadd.xlane.f32.xlu0 %v1486
  %v1488 = vpop.xlane.xlu0 %1487
  %v1489 = vsel %vm1364, %v1459, 0.0
  %1490 = vadd.xlane.f32.xlu0 %v1489
  %v1491 = vpop.xlane.xlu0 %1490
  %v1492 = vsel %vm1364, %v1460, 0.0
  %1493 = vadd.xlane.f32.xlu0 %v1492
  %v1494 = vpop.xlane.xlu0 %1493
  %v1495 = vsel %vm1364, %v1461, 0.0
  %1496 = vadd.xlane.f32.xlu0 %v1495
  %v1497 = vpop.xlane.xlu0 %1496
  %v1498 = vsel %vm1364, %v1462, 0.0
  %1499 = vadd.xlane.f32.xlu0 %v1498
  %v1500 = vpop.xlane.xlu0 %1499
  %v1501 = vsel %vm1364, %v1463, 0.0
  %1502 = vadd.xlane.f32.xlu0 %v1501
  %v1503 = vpop.xlane.xlu0 %1502
  %v1504 = vsel %vm1364, %v1464, 0.0
  %1505 = vadd.xlane.f32.xlu0 %v1504
  %v1506 = vpop.xlane.xlu0 %1505
  %v1507 = vsel %vm1364, %v1465, 0.0
  %1508 = vadd.xlane.f32.xlu0 %v1507
  %v1509 = vpop.xlane.xlu0 %1508
  %v1510 = vsel %vm1364, %v1466, 0.0
  %1511 = vadd.xlane.f32.xlu0 %v1510
  %v1512 = vpop.xlane.xlu0 %1511
  %v1513 = vsel %vm1364, %v1467, 0.0
  %1514 = vadd.xlane.f32.xlu0 %v1513
  %v1515 = vpop.xlane.xlu0 %1514
  %v1516 = vmul.f32 %v1470, %v1419
  %v1517 = vmul.f32 %v1473, %v1419
  %v1518 = vmul.f32 %v1476, %v1419
  %v1519 = vmul.f32 %v1479, %v1419
  %v1520 = vmul.f32 %v1482, %v1419
  %v1521 = vmul.f32 %v1485, %v1419
  %v1522 = vmul.f32 %v1488, %v1419
  %v1523 = vmul.f32 %v1491, %v1419
  %v1524 = vmul.f32 %v1494, %v1419
  %v1525 = vmul.f32 %v1497, %v1419
  %v1526 = vmul.f32 %v1500, %v1419
  %v1527 = vmul.f32 %v1503, %v1419
  %v1528 = vmul.f32 %v1506, %v1419
  %v1529 = vmul.f32 %v1509, %v1419
  %v1530 = vmul.f32 %v1512, %v1419
  %v1531 = vmul.f32 %v1515, %v1419
  %v1532 = vadd.f32 %v1516, 1e-05
  %v1533 = vadd.f32 %v1517, 1e-05
  %v1534 = vadd.f32 %v1518, 1e-05
  %v1535 = vadd.f32 %v1519, 1e-05
  %v1536 = vadd.f32 %v1520, 1e-05
  %v1537 = vadd.f32 %v1521, 1e-05
  %v1538 = vadd.f32 %v1522, 1e-05
  %v1539 = vadd.f32 %v1523, 1e-05
  %v1540 = vadd.f32 %v1524, 1e-05
  %v1541 = vadd.f32 %v1525, 1e-05
  %v1542 = vadd.f32 %v1526, 1e-05
  %v1543 = vadd.f32 %v1527, 1e-05
  %v1544 = vadd.f32 %v1528, 1e-05
  %v1545 = vadd.f32 %v1529, 1e-05
  %v1546 = vadd.f32 %v1530, 1e-05
  %v1547 = vadd.f32 %v1531, 1e-05
  %v1548 = vrsqrt.pop %v1532
  %v1549 = vmul.f32 %v1548, %v1532
  %v1550 = vmul.f32 %v1549, %v1548
  %v1551 = vmul.f32 0.5, %v1550
  %v1552 = vsub.f32 1.5, %v1551
  %v1553 = vmul.f32 %v1548, %v1552
  %vm1554 = vweird.f32 %v1532
  %vm1555 = vweird.f32 %v1548
  %vm1556 = vmor %vm1554, %vm1555
  %v1557 = vsel %vm1556, %v1548, %v1553
  %v1558 = vrsqrt.pop %v1533
  %v1559 = vmul.f32 %v1558, %v1533
  %v1560 = vmul.f32 %v1559, %v1558
  %v1561 = vmul.f32 0.5, %v1560
  %v1562 = vsub.f32 1.5, %v1561
  %v1563 = vmul.f32 %v1558, %v1562
  %vm1564 = vweird.f32 %v1533
  %vm1565 = vweird.f32 %v1558
  %vm1566 = vmor %vm1564, %vm1565
  %v1567 = vsel %vm1566, %v1558, %v1563
  %v1568 = vrsqrt.pop %v1534
  %v1569 = vmul.f32 %v1568, %v1534
  %v1570 = vmul.f32 %v1569, %v1568
  %v1571 = vmul.f32 0.5, %v1570
  %v1572 = vsub.f32 1.5, %v1571
  %v1573 = vmul.f32 %v1568, %v1572
  %vm1574 = vweird.f32 %v1534
  %vm1575 = vweird.f32 %v1568
  %vm1576 = vmor %vm1574, %vm1575
  %v1577 = vsel %vm1576, %v1568, %v1573
  %v1578 = vrsqrt.pop %v1535
  %v1579 = vmul.f32 %v1578, %v1535
  %v1580 = vmul.f32 %v1579, %v1578
  %v1581 = vmul.f32 0.5, %v1580
  %v1582 = vsub.f32 1.5, %v1581
  %v1583 = vmul.f32 %v1578, %v1582
  %vm1584 = vweird.f32 %v1535
  %vm1585 = vweird.f32 %v1578
  %vm1586 = vmor %vm1584, %vm1585
  %v1587 = vsel %vm1586, %v1578, %v1583
  %v1588 = vrsqrt.pop %v1536
  %v1589 = vmul.f32 %v1588, %v1536
  %v1590 = vmul.f32 %v1589, %v1588
  %v1591 = vmul.f32 0.5, %v1590
  %v1592 = vsub.f32 1.5, %v1591
  %v1593 = vmul.f32 %v1588, %v1592
  %vm1594 = vweird.f32 %v1536
  %vm1595 = vweird.f32 %v1588
  %vm1596 = vmor %vm1594, %vm1595
  %v1597 = vsel %vm1596, %v1588, %v1593
  %v1598 = vrsqrt.pop %v1537
  %v1599 = vmul.f32 %v1598, %v1537
  %v1600 = vmul.f32 %v1599, %v1598
  %v1601 = vmul.f32 0.5, %v1600
  %v1602 = vsub.f32 1.5, %v1601
  %v1603 = vmul.f32 %v1598, %v1602
  %vm1604 = vweird.f32 %v1537
  %vm1605 = vweird.f32 %v1598
  %vm1606 = vmor %vm1604, %vm1605
  %v1607 = vsel %vm1606, %v1598, %v1603
  %v1608 = vrsqrt.pop %v1538
  %v1609 = vmul.f32 %v1608, %v1538
  %v1610 = vmul.f32 %v1609, %v1608
  %v1611 = vmul.f32 0.5, %v1610
  %v1612 = vsub.f32 1.5, %v1611
  %v1613 = vmul.f32 %v1608, %v1612
  %vm1614 = vweird.f32 %v1538
  %vm1615 = vweird.f32 %v1608
  %vm1616 = vmor %vm1614, %vm1615
  %v1617 = vsel %vm1616, %v1608, %v1613
  %v1618 = vrsqrt.pop %v1539
  %v1619 = vmul.f32 %v1618, %v1539
  %v1620 = vmul.f32 %v1619, %v1618
  %v1621 = vmul.f32 0.5, %v1620
  %v1622 = vsub.f32 1.5, %v1621
  %v1623 = vmul.f32 %v1618, %v1622
  %vm1624 = vweird.f32 %v1539
  %vm1625 = vweird.f32 %v1618
  %vm1626 = vmor %vm1624, %vm1625
  %v1627 = vsel %vm1626, %v1618, %v1623
  %v1628 = vrsqrt.pop %v1540
  %v1629 = vmul.f32 %v1628, %v1540
  %v1630 = vmul.f32 %v1629, %v1628
  %v1631 = vmul.f32 0.5, %v1630
  %v1632 = vsub.f32 1.5, %v1631
  %v1633 = vmul.f32 %v1628, %v1632
  %vm1634 = vweird.f32 %v1540
  %vm1635 = vweird.f32 %v1628
  %vm1636 = vmor %vm1634, %vm1635
  %v1637 = vsel %vm1636, %v1628, %v1633
  %v1638 = vrsqrt.pop %v1541
  %v1639 = vmul.f32 %v1638, %v1541
  %v1640 = vmul.f32 %v1639, %v1638
  %v1641 = vmul.f32 0.5, %v1640
  %v1642 = vsub.f32 1.5, %v1641
  %v1643 = vmul.f32 %v1638, %v1642
  %vm1644 = vweird.f32 %v1541
  %vm1645 = vweird.f32 %v1638
  %vm1646 = vmor %vm1644, %vm1645
  %v1647 = vsel %vm1646, %v1638, %v1643
  %v1648 = vrsqrt.pop %v1542
  %v1649 = vmul.f32 %v1648, %v1542
  %v1650 = vmul.f32 %v1649, %v1648
  %v1651 = vmul.f32 0.5, %v1650
  %v1652 = vsub.f32 1.5, %v1651
  %v1653 = vmul.f32 %v1648, %v1652
  %vm1654 = vweird.f32 %v1542
  %vm1655 = vweird.f32 %v1648
  %vm1656 = vmor %vm1654, %vm1655
  %v1657 = vsel %vm1656, %v1648, %v1653
  %v1658 = vrsqrt.pop %v1543
  %v1659 = vmul.f32 %v1658, %v1543
  %v1660 = vmul.f32 %v1659, %v1658
  %v1661 = vmul.f32 0.5, %v1660
  %v1662 = vsub.f32 1.5, %v1661
  %v1663 = vmul.f32 %v1658, %v1662
  %vm1664 = vweird.f32 %v1543
  %vm1665 = vweird.f32 %v1658
  %vm1666 = vmor %vm1664, %vm1665
  %v1667 = vsel %vm1666, %v1658, %v1663
  %v1668 = vrsqrt.pop %v1544
  %v1669 = vmul.f32 %v1668, %v1544
  %v1670 = vmul.f32 %v1669, %v1668
  %v1671 = vmul.f32 0.5, %v1670
  %v1672 = vsub.f32 1.5, %v1671
  %v1673 = vmul.f32 %v1668, %v1672
  %vm1674 = vweird.f32 %v1544
  %vm1675 = vweird.f32 %v1668
  %vm1676 = vmor %vm1674, %vm1675
  %v1677 = vsel %vm1676, %v1668, %v1673
  %v1678 = vrsqrt.pop %v1545
  %v1679 = vmul.f32 %v1678, %v1545
  %v1680 = vmul.f32 %v1679, %v1678
  %v1681 = vmul.f32 0.5, %v1680
  %v1682 = vsub.f32 1.5, %v1681
  %v1683 = vmul.f32 %v1678, %v1682
  %vm1684 = vweird.f32 %v1545
  %vm1685 = vweird.f32 %v1678
  %vm1686 = vmor %vm1684, %vm1685
  %v1687 = vsel %vm1686, %v1678, %v1683
  %v1688 = vrsqrt.pop %v1546
  %v1689 = vmul.f32 %v1688, %v1546
  %v1690 = vmul.f32 %v1689, %v1688
  %v1691 = vmul.f32 0.5, %v1690
  %v1692 = vsub.f32 1.5, %v1691
  %v1693 = vmul.f32 %v1688, %v1692
  %vm1694 = vweird.f32 %v1546
  %vm1695 = vweird.f32 %v1688
  %vm1696 = vmor %vm1694, %vm1695
  %v1697 = vsel %vm1696, %v1688, %v1693
  %v1698 = vrsqrt.pop %v1547
  %v1699 = vmul.f32 %v1698, %v1547
  %v1700 = vmul.f32 %v1699, %v1698
  %v1701 = vmul.f32 0.5, %v1700
  %v1702 = vsub.f32 1.5, %v1701
  %v1703 = vmul.f32 %v1698, %v1702
  %vm1704 = vweird.f32 %v1547
  %vm1705 = vweird.f32 %v1698
  %vm1706 = vmor %vm1704, %vm1705
  %v1707 = vsel %vm1706, %v1698, %v1703
  %v1708 = vmul.f32 %v1436, %v1557
  %v1709 = vmul.f32 %v1437, %v1567
  %v1710 = vmul.f32 %v1438, %v1577
  %v1711 = vmul.f32 %v1439, %v1587
  %v1712 = vmul.f32 %v1440, %v1597
  %v1713 = vmul.f32 %v1441, %v1607
  %v1714 = vmul.f32 %v1442, %v1617
  %v1715 = vmul.f32 %v1443, %v1627
  %v1716 = vmul.f32 %v1444, %v1637
  %v1717 = vmul.f32 %v1445, %v1647
  %v1718 = vmul.f32 %v1446, %v1657
  %v1719 = vmul.f32 %v1447, %v1667
  %v1720 = vmul.f32 %v1448, %v1677
  %v1721 = vmul.f32 %v1449, %v1687
  %v1722 = vmul.f32 %v1450, %v1697
  %v1723 = vmul.f32 %v1451, %v1707
  %v1724 = vld [vmem:[%s2] sm:$0xff]
  %v1725 = vld [vmem:[%s2 + $0x8] sm:$0xff]
  %v1726 = vld [vmem:[%s2 + $0x10] sm:$0xff]
  %v1727 = vld [vmem:[%s2 + $0x18] sm:$0xff]
  %v1728 = vld [vmem:[%s2 + $0x20] sm:$0xff]
  %v1729 = vld [vmem:[%s2 + $0x28] sm:$0xff]
  %v1730 = vld [vmem:[%s2 + $0x30] sm:$0xff]
  %v1731 = vld [vmem:[%s2 + $0x38] sm:$0xff]
  %v1732 = vld [vmem:[%s2 + $0x40] sm:$0xff]
  %v1733 = vld [vmem:[%s2 + $0x48] sm:$0xff]
  %v1734 = vld [vmem:[%s2 + $0x50] sm:$0xff]
  %v1735 = vld [vmem:[%s2 + $0x58] sm:$0xff]
  %v1736 = vld [vmem:[%s2 + $0x60] sm:$0xff]
  %v1737 = vld [vmem:[%s2 + $0x68] sm:$0xff]
  %v1738 = vld [vmem:[%s2 + $0x70] sm:$0xff]
  %v1739 = vld [vmem:[%s2 + $0x78] sm:$0xff]
  %1741 = vset.pattern.permute.xlu0 0
  %1742 = vperm.xlu0 %1741, %v1724
  %v1743 = vpop.permute.xlu0 %1742
  %1746 = vset.pattern.permute.xlu0 0
  %1747 = vperm.xlu0 %1746, %v1725
  %v1748 = vpop.permute.xlu0 %1747
  %1751 = vset.pattern.permute.xlu0 0
  %1752 = vperm.xlu0 %1751, %v1726
  %v1753 = vpop.permute.xlu0 %1752
  %1756 = vset.pattern.permute.xlu0 0
  %1757 = vperm.xlu0 %1756, %v1727
  %v1758 = vpop.permute.xlu0 %1757
  %1761 = vset.pattern.permute.xlu0 0
  %1762 = vperm.xlu0 %1761, %v1728
  %v1763 = vpop.permute.xlu0 %1762
  %1766 = vset.pattern.permute.xlu0 0
  %1767 = vperm.xlu0 %1766, %v1729
  %v1768 = vpop.permute.xlu0 %1767
  %1771 = vset.pattern.permute.xlu0 0
  %1772 = vperm.xlu0 %1771, %v1730
  %v1773 = vpop.permute.xlu0 %1772
  %1776 = vset.pattern.permute.xlu0 0
  %1777 = vperm.xlu0 %1776, %v1731
  %v1778 = vpop.permute.xlu0 %1777
  %1781 = vset.pattern.permute.xlu0 0
  %1782 = vperm.xlu0 %1781, %v1732
  %v1783 = vpop.permute.xlu0 %1782
  %1786 = vset.pattern.permute.xlu0 0
  %1787 = vperm.xlu0 %1786, %v1733
  %v1788 = vpop.permute.xlu0 %1787
  %1791 = vset.pattern.permute.xlu0 0
  %1792 = vperm.xlu0 %1791, %v1734
  %v1793 = vpop.permute.xlu0 %1792
  %1796 = vset.pattern.permute.xlu0 0
  %1797 = vperm.xlu0 %1796, %v1735
  %v1798 = vpop.permute.xlu0 %1797
  %1801 = vset.pattern.permute.xlu0 0
  %1802 = vperm.xlu0 %1801, %v1736
  %v1803 = vpop.permute.xlu0 %1802
  %1806 = vset.pattern.permute.xlu0 0
  %1807 = vperm.xlu0 %1806, %v1737
  %v1808 = vpop.permute.xlu0 %1807
  %1811 = vset.pattern.permute.xlu0 0
  %1812 = vperm.xlu0 %1811, %v1738
  %v1813 = vpop.permute.xlu0 %1812
  %1816 = vset.pattern.permute.xlu0 0
  %1817 = vperm.xlu0 %1816, %v1739
  %v1818 = vpop.permute.xlu0 %1817
  %v1820 = vmul.f32 %v1708, %v1743
  %v1821 = vmul.f32 %v1709, %v1748
  %v1822 = vmul.f32 %v1710, %v1753
  %v1823 = vmul.f32 %v1711, %v1758
  %v1824 = vmul.f32 %v1712, %v1763
  %v1825 = vmul.f32 %v1713, %v1768
  %v1826 = vmul.f32 %v1714, %v1773
  %v1827 = vmul.f32 %v1715, %v1778
  %v1828 = vmul.f32 %v1716, %v1783
  %v1829 = vmul.f32 %v1717, %v1788
  %v1830 = vmul.f32 %v1718, %v1793
  %v1831 = vmul.f32 %v1719, %v1798
  %v1832 = vmul.f32 %v1720, %v1803
  %v1833 = vmul.f32 %v1721, %v1808
  %v1834 = vmul.f32 %v1722, %v1813
  %v1835 = vmul.f32 %v1723, %v1818
  %v1836 = vld [vmem:[%s3] sm:$0xff]
  %v1837 = vld [vmem:[%s3 + $0x8] sm:$0xff]
  %v1838 = vld [vmem:[%s3 + $0x10] sm:$0xff]
  %v1839 = vld [vmem:[%s3 + $0x18] sm:$0xff]
  %v1840 = vld [vmem:[%s3 + $0x20] sm:$0xff]
  %v1841 = vld [vmem:[%s3 + $0x28] sm:$0xff]
  %v1842 = vld [vmem:[%s3 + $0x30] sm:$0xff]
  %v1843 = vld [vmem:[%s3 + $0x38] sm:$0xff]
  %v1844 = vld [vmem:[%s3 + $0x40] sm:$0xff]
  %v1845 = vld [vmem:[%s3 + $0x48] sm:$0xff]
  %v1846 = vld [vmem:[%s3 + $0x50] sm:$0xff]
  %v1847 = vld [vmem:[%s3 + $0x58] sm:$0xff]
  %v1848 = vld [vmem:[%s3 + $0x60] sm:$0xff]
  %v1849 = vld [vmem:[%s3 + $0x68] sm:$0xff]
  %v1850 = vld [vmem:[%s3 + $0x70] sm:$0xff]
  %v1851 = vld [vmem:[%s3 + $0x78] sm:$0xff]
  %1853 = vset.pattern.permute.xlu0 0
  %1854 = vperm.xlu0 %1853, %v1836
  %v1855 = vpop.permute.xlu0 %1854
  %1858 = vset.pattern.permute.xlu0 0
  %1859 = vperm.xlu0 %1858, %v1837
  %v1860 = vpop.permute.xlu0 %1859
  %1863 = vset.pattern.permute.xlu0 0
  %1864 = vperm.xlu0 %1863, %v1838
  %v1865 = vpop.permute.xlu0 %1864
  %1868 = vset.pattern.permute.xlu0 0
  %1869 = vperm.xlu0 %1868, %v1839
  %v1870 = vpop.permute.xlu0 %1869
  %1873 = vset.pattern.permute.xlu0 0
  %1874 = vperm.xlu0 %1873, %v1840
  %v1875 = vpop.permute.xlu0 %1874
  %1878 = vset.pattern.permute.xlu0 0
  %1879 = vperm.xlu0 %1878, %v1841
  %v1880 = vpop.permute.xlu0 %1879
  %1883 = vset.pattern.permute.xlu0 0
  %1884 = vperm.xlu0 %1883, %v1842
  %v1885 = vpop.permute.xlu0 %1884
  %1888 = vset.pattern.permute.xlu0 0
  %1889 = vperm.xlu0 %1888, %v1843
  %v1890 = vpop.permute.xlu0 %1889
  %1893 = vset.pattern.permute.xlu0 0
  %1894 = vperm.xlu0 %1893, %v1844
  %v1895 = vpop.permute.xlu0 %1894
  %1898 = vset.pattern.permute.xlu0 0
  %1899 = vperm.xlu0 %1898, %v1845
  %v1900 = vpop.permute.xlu0 %1899
  %1903 = vset.pattern.permute.xlu0 0
  %1904 = vperm.xlu0 %1903, %v1846
  %v1905 = vpop.permute.xlu0 %1904
  %1908 = vset.pattern.permute.xlu0 0
  %1909 = vperm.xlu0 %1908, %v1847
  %v1910 = vpop.permute.xlu0 %1909
  %1913 = vset.pattern.permute.xlu0 0
  %1914 = vperm.xlu0 %1913, %v1848
  %v1915 = vpop.permute.xlu0 %1914
  %1918 = vset.pattern.permute.xlu0 0
  %1919 = vperm.xlu0 %1918, %v1849
  %v1920 = vpop.permute.xlu0 %1919
  %1923 = vset.pattern.permute.xlu0 0
  %1924 = vperm.xlu0 %1923, %v1850
  %v1925 = vpop.permute.xlu0 %1924
  %1928 = vset.pattern.permute.xlu0 0
  %1929 = vperm.xlu0 %1928, %v1851
  %v1930 = vpop.permute.xlu0 %1929
  %v1932 = vadd.f32 %v1820, %v1855
  %v1933 = vadd.f32 %v1821, %v1860
  %v1934 = vadd.f32 %v1822, %v1865
  %v1935 = vadd.f32 %v1823, %v1870
  %v1936 = vadd.f32 %v1824, %v1875
  %v1937 = vadd.f32 %v1825, %v1880
  %v1938 = vadd.f32 %v1826, %v1885
  %v1939 = vadd.f32 %v1827, %v1890
  %v1940 = vadd.f32 %v1828, %v1895
  %v1941 = vadd.f32 %v1829, %v1900
  %v1942 = vadd.f32 %v1830, %v1905
  %v1943 = vadd.f32 %v1831, %v1910
  %v1944 = vadd.f32 %v1832, %v1915
  %v1945 = vadd.f32 %v1833, %v1920
  %v1946 = vadd.f32 %v1834, %v1925
  %v1947 = vadd.f32 %v1835, %v1930
  %1948 = vst.msk [vmem:[%s4] sm:$0xff] %vm1364, %v1932
  %1949 = vst.msk [vmem:[%s4 + $0x8] sm:$0xff] %vm1364, %v1933
  %1950 = vst.msk [vmem:[%s4 + $0x10] sm:$0xff] %vm1364, %v1934
  %1951 = vst.msk [vmem:[%s4 + $0x18] sm:$0xff] %vm1364, %v1935
  %1952 = vst.msk [vmem:[%s4 + $0x20] sm:$0xff] %vm1364, %v1936
  %1953 = vst.msk [vmem:[%s4 + $0x28] sm:$0xff] %vm1364, %v1937
  %1954 = vst.msk [vmem:[%s4 + $0x30] sm:$0xff] %vm1364, %v1938
  %1955 = vst.msk [vmem:[%s4 + $0x38] sm:$0xff] %vm1364, %v1939
  %1956 = vst.msk [vmem:[%s4 + $0x40] sm:$0xff] %vm1364, %v1940
  %1957 = vst.msk [vmem:[%s4 + $0x48] sm:$0xff] %vm1364, %v1941
  %1958 = vst.msk [vmem:[%s4 + $0x50] sm:$0xff] %vm1364, %v1942
  %1959 = vst.msk [vmem:[%s4 + $0x58] sm:$0xff] %vm1364, %v1943
  %1960 = vst.msk [vmem:[%s4 + $0x60] sm:$0xff] %vm1364, %v1944
  %1961 = vst.msk [vmem:[%s4 + $0x68] sm:$0xff] %vm1364, %v1945
  %1962 = vst.msk [vmem:[%s4 + $0x70] sm:$0xff] %vm1364, %v1946
  %1963 = vst.msk [vmem:[%s4 + $0x78] sm:$0xff] %vm1364, %v1947
  // Predicated region
  $region18: #{conv2d_batchnorm.1} parent=0 // pred_check
    _
  $region19: #{conv2d_batchnorm.1} parent=0 // pred_check_branch
    %1965 = sbr.rel (0) target = $region21
  $region20: #{conv2d_batchnorm.1} parent=0 // pred_region
    _
  $region21: #{conv2d_batchnorm.1} parent=0 // pred_fallthru
    _
  // Predicated region
  $region22: #{conv2d_batchnorm.1} parent=0 // pred_check
    _
  $region23: #{conv2d_batchnorm.1} parent=0 // pred_check_branch
    %1967 = sbr.rel (0) target = $region25
  $region24: #{conv2d_batchnorm.1} parent=0 // pred_region
    _
  $region25: #{conv2d_batchnorm.1} parent=0 // pred_fallthru
    _

</llo_original>
